<compile_context>
chip_gen: v5e
topology: v5e:2x2
jax: 0.10.0
libtpu: 0.0.40
codegen_flags: <defaults>
</compile_context>

<pallas_src>
import functools

import jax
import jax.numpy as jnp
from jax.experimental import pallas as pl
from jax.experimental.pallas import tpu as pltpu

LANE = 128
SUBLANE = 16          # bf16 sublane packing -> batch tiles kept multiples of 16
_MIB = 1024 * 1024


def _round_up(n, m):
    return ((n + m - 1) // m) * m


# ---------------------------------------------------------------------------
# Fused MLP kernel.  Ref order: x, w0, b0, w1, b1, ..., out.
# Intermediates stay on-chip; no HBM round-trips between layers.
# ---------------------------------------------------------------------------
def _fused_mlp_kernel(x_ref, *rest):
    out_ref = rest[-1]
    num_layers = (len(rest) - 1) // 2
    h = x_ref[...]                                      # already bf16 (wrapper cast)
    for i in range(num_layers):
        w = rest[2 * i][...]                            # bf16 (Fin,  Fout_p)
        b = rest[2 * i + 1][...]                        # f32  (1,    Fout_p)
        y = jnp.dot(h, w, preferred_element_type=jnp.float32) + b   # f32 epilogue
        if i != num_layers - 1:
            h = jnp.maximum(y, 0.0).astype(jnp.bfloat16)
        else:
            h = y
    out_ref[...] = h.astype(out_ref.dtype)


# ---------------------------------------------------------------------------
# One-time parameter layout (hoisted out of the forward pass).
# Only the OUTPUT (lane) dim is padded to a 128 multiple; the contraction dim
# of layer 0 stays at input_size (784), and layer i>0's input dim matches the
# previous layer's padded output.  Padded cols/rows/bias entries are zero, so
# padded lanes carry exact zeros through ReLU and subsequent matmuls.
# ---------------------------------------------------------------------------
def prepare_params(params):
    padded = []
    prev_out_p = None
    for w, b in params:
        fin, fout = w.shape
        fin_p = fin if prev_out_p is None else prev_out_p
        fout_p = _round_up(fout, LANE)
        w_p = jnp.zeros((fin_p, fout_p), jnp.bfloat16)
        w_p = w_p.at[:fin, :fout].set(w.astype(jnp.bfloat16))
        b_p = jnp.zeros((1, fout_p), jnp.float32)
        b_p = b_p.at[0, :fout].set(b.astype(jnp.float32))
        padded.append((w_p, b_p))
        prev_out_p = fout_p
    return padded


# ---------------------------------------------------------------------------
# Per-generation batch tiling: 1 tile (no grid) on single-TC chips, exactly
# 2 parallel tiles on v7x (megacore).
# ---------------------------------------------------------------------------
def _pick_batch_tile(B):
    try:
        kind = jax.devices()[0].device_kind.lower()
    except Exception:  # pragma: no cover - non-TPU fallback
        kind = ""
    n_cores = 2 if "v7" in kind else 1
    return max(_round_up(pl.cdiv(B, n_cores), SUBLANE), SUBLANE)


# ---------------------------------------------------------------------------
# pallas_call wrappers.
# ---------------------------------------------------------------------------
def _call_fused_mlp(x_bf16, padded_params, batch_tile):
    B, fin = x_bf16.shape
    fout_p = padded_params[-1][0].shape[1]
    flat = [t for wb in padded_params for t in wb]
    n_in = 1 + len(flat)

    # VMEM budget: 2x double-buffered x tile + 2x output tile + resident params.
    tile_rows = min(B, batch_tile)
    est = 2 * tile_rows * fin * 2 + 2 * tile_rows * fout_p * 4
    est += sum(int(t.size) * t.dtype.itemsize for t in flat)
    vmem_limit = None
    if est > 12 * _MIB:                     # only override near the default cap
        vmem_limit = min(_round_up(int(est * 3 // 2), _MIB), 96 * _MIB)

    if B <= batch_tile:
        # Single tile: no grid, no pipelining bookkeeping — everything in VMEM.
        cp = (pltpu.CompilerParams(vmem_limit_bytes=vmem_limit)
              if vmem_limit else None)
        return pl.pallas_call(
            _fused_mlp_kernel,
            out_shape=jax.ShapeDtypeStruct((B, fout_p), jnp.float32),
            in_specs=[pl.BlockSpec(memory_space=pltpu.MemorySpace.VMEM)] * n_in,
            out_specs=pl.BlockSpec(memory_space=pltpu.MemorySpace.VMEM),
            compiler_params=cp,
        )(x_bf16, *flat)

    # Batch tiled on a parallel grid axis (shards across v7x's 2 TensorCores).
    # Weights/biases use constant index_maps so they stay VMEM-resident across
    # batch tiles (no re-DMA between grid steps).
    assert B % batch_tile == 0
    grid = (B // batch_tile,)
    in_specs = [pl.BlockSpec((batch_tile, fin), lambda i: (i, 0))]
    for w_p, b_p in padded_params:
        in_specs.append(pl.BlockSpec(w_p.shape, lambda i: (0, 0)))
        in_specs.append(pl.BlockSpec(b_p.shape, lambda i: (0, 0)))
    return pl.pallas_call(
        _fused_mlp_kernel,
        out_shape=jax.ShapeDtypeStruct((B, fout_p), jnp.float32),
        grid=grid,
        in_specs=in_specs,
        out_specs=pl.BlockSpec((batch_tile, fout_p), lambda i: (i, 0)),
        compiler_params=pltpu.CompilerParams(
            dimension_semantics=("parallel",),
            vmem_limit_bytes=vmem_limit),
    )(x_bf16, *flat)


@functools.partial(jax.jit, static_argnames=("num_classes", "batch_tile"))
def mnist_network_forward(x, padded_params, *, num_classes, batch_tile=None):
    """Forward pass matching MnistNetwork.forward: Linear (+ReLU) chain."""
    B, fin = x.shape
    assert fin == padded_params[0][0].shape[0], "input_size mismatch"
    x = x.astype(jnp.bfloat16)                 # fuse cast with the input copy
    if batch_tile is None:
        batch_tile = _pick_batch_tile(B)       # trace-time, per-generation
    if B > batch_tile and B % batch_tile != 0:
        x = jnp.pad(x, ((0, batch_tile - (B % batch_tile)), (0, 0)))
    out_p = _call_fused_mlp(x, padded_params, batch_tile)
    # TODO(synk): downstream consumers could read the padded (B, 128) logits
    # directly (or take bf16) to avoid this extra XLA slice pass.
    return out_p[:B, :num_classes]


# ---------------------------------------------------------------------------
# Param init (mimics torch.nn.Linear default: U(+/- 1/sqrt(fan_in))) and
# a pure-JAX reference using the same bf16-matmul / f32-accumulate scheme.
# ---------------------------------------------------------------------------
def init_mlp_params(key, input_size, hidden_dims, num_classes, dtype=jnp.float32):
    all_dims = [input_size] + list(hidden_dims) + [num_classes]
    params = []
    for i in range(len(all_dims) - 1):
        fan_in, fan_out = all_dims[i], all_dims[i + 1]
        key, kw, kb = jax.random.split(key, 3)
        bound = 1.0 / (fan_in ** 0.5)
        w = jax.random.uniform(kw, (fan_in, fan_out), dtype, -bound, bound)
        b = jax.random.uniform(kb, (fan_out,), dtype, -bound, bound)
        params.append((w, b))
    return params


def reference_forward(x, params):
    n = len(params)
    h = x.astype(jnp.bfloat16)
    for i, (w, b) in enumerate(params):
        y = jnp.dot(h, w.astype(jnp.bfloat16),
                    preferred_element_type=jnp.float32) + b.astype(jnp.float32)
        if i != n - 1:
            h = jnp.maximum(y, 0.0).astype(jnp.bfloat16)
        else:
            h = y
    return h


if __name__ == "__main__":
    # Real MNIST-MLP sizes; batch large enough to feed the MXU and to make the
    # explicit 2-tile grid path (v7x-style) exercisable on any generation.
    batch = 256
    input_size = 784
    hidden_dims = [128]
    num_classes = 10

    key = jax.random.PRNGKey(0)
    k_x, k_p = jax.random.split(key)
    x = jax.random.normal(k_x, (batch, input_size), dtype=jnp.float32)
    params = init_mlp_params(k_p, input_size, hidden_dims, num_classes)

    # Parameter padding / dtype layout done once, outside the forward pass.
    padded_params = prepare_params(params)
    ref = reference_forward(x, params)

    # 1) Auto-tiled path (whole-batch no-grid on v5e/v6e, 2 parallel tiles on v7x).
    out_auto = mnist_network_forward(x, padded_params, num_classes=num_classes)
    out_auto = jax.block_until_ready(out_auto)
    assert out_auto.shape == (batch, num_classes)
    assert jnp.allclose(out_auto, ref, atol=1e-3, rtol=1e-3), (
        f"auto path: max abs err = {float(jnp.max(jnp.abs(out_auto - ref)))}")

    # 2) Explicit grid path (two 128-row parallel tiles) — always exercised.
    out_grid = mnist_network_forward(x, padded_params,
                                     num_classes=num_classes, batch_tile=128)
    out_grid = jax.block_until_ready(out_grid)
    assert out_grid.shape == (batch, num_classes)
    assert jnp.allclose(out_grid, ref, atol=1e-3, rtol=1e-3), (
        f"grid path: max abs err = {float(jnp.max(jnp.abs(out_grid - ref)))}")

    print("KERNEL_OK")
</pallas_src>

<mosaic_0001>
module attributes {stable_mosaic.version = 11 : i64} {
  func.func @_fused_mlp_kernel(%arg0: memref<256x784xbf16, #tpu.memory_space<vmem>>, %arg1: memref<784x128xbf16, #tpu.memory_space<vmem>>, %arg2: memref<1x128xf32, #tpu.memory_space<vmem>>, %arg3: memref<128x128xbf16, #tpu.memory_space<vmem>>, %arg4: memref<1x128xf32, #tpu.memory_space<vmem>>, %arg5: memref<256x128xf32, #tpu.memory_space<vmem>>) attributes {dimension_semantics = [], scalar_prefetch = 0 : i64, scratch_operands = 0 : i64, tpu.core_type = #tpu.core_type<tc>} {
    %c0 = arith.constant 0 : index
    %c0_0 = arith.constant 0 : index
    %0 = vector.load %arg0[%c0, %c0_0] : memref<256x784xbf16, #tpu.memory_space<vmem>>, vector<256x784xbf16>
    %c0_1 = arith.constant 0 : index
    %c0_2 = arith.constant 0 : index
    %1 = vector.load %arg1[%c0_1, %c0_2] : memref<784x128xbf16, #tpu.memory_space<vmem>>, vector<784x128xbf16>
    %c0_3 = arith.constant 0 : index
    %c0_4 = arith.constant 0 : index
    %2 = vector.load %arg2[%c0_3, %c0_4] : memref<1x128xf32, #tpu.memory_space<vmem>>, vector<1x128xf32>
    %cst = arith.constant dense<0.000000e+00> : vector<256x128xf32>
    %3 = tpu.matmul %0, %1, %cst {dimension_numbers = #tpu.dot_dimension_numbers<[1], [0], [0], [1], [0, 0, 1, 1], [], []>} : vector<256x784xbf16>, vector<784x128xbf16>, vector<256x128xf32> -> vector<256x128xf32>
    %4 = vector.broadcast %2 : vector<1x128xf32> to vector<256x128xf32>
    %5 = arith.addf %3, %4 : vector<256x128xf32>
    %cst_5 = arith.constant 0.000000e+00 : f32
    %6 = vector.broadcast %cst_5 : f32 to vector<256x128xf32>
    %7 = arith.maximumf %5, %6 : vector<256x128xf32>
    %8 = arith.truncf %7 : vector<256x128xf32> to vector<256x128xbf16>
    %c0_6 = arith.constant 0 : index
    %c0_7 = arith.constant 0 : index
    %9 = vector.load %arg3[%c0_6, %c0_7] : memref<128x128xbf16, #tpu.memory_space<vmem>>, vector<128x128xbf16>
    %c0_8 = arith.constant 0 : index
    %c0_9 = arith.constant 0 : index
    %10 = vector.load %arg4[%c0_8, %c0_9] : memref<1x128xf32, #tpu.memory_space<vmem>>, vector<1x128xf32>
    %cst_10 = arith.constant dense<0.000000e+00> : vector<256x128xf32>
    %11 = tpu.matmul %8, %9, %cst_10 {dimension_numbers = #tpu.dot_dimension_numbers<[1], [0], [0], [1], [0, 0, 1, 1], [], []>} : vector<256x128xbf16>, vector<128x128xbf16>, vector<256x128xf32> -> vector<256x128xf32>
    %12 = vector.broadcast %10 : vector<1x128xf32> to vector<256x128xf32>
    %13 = arith.addf %11, %12 : vector<256x128xf32>
    %c0_11 = arith.constant 0 : index
    %c0_12 = arith.constant 0 : index
    %14 = vector.load %arg5[%c0_11, %c0_12] : memref<256x128xf32, #tpu.memory_space<vmem>>, vector<256x128xf32>
    tpu.vector_store %arg5[%c0_11, %c0_12], %13 {strides = array<i32>} : memref<256x128xf32, #tpu.memory_space<vmem>>, vector<256x128xf32>,
    return
  }
}

</mosaic_0001>

<llo_original>
// kernel: mnist_network_forward.1
$region0: #{mnist_network_forward.1}
  #allocation0 [shape = 'u32[]', space=smem, size = 0x4, offset = 0x4, fixed_abs, tag = 'smem constant byte address 0x4 - core index']
  #allocation1 [shape = 'u32[72,128]{1,0:T(1,128)}', space=vmem, size = 0x9000, scoped, tag = 'internal scratch']
  %s0 = inlined_call_operand.vmem [shape: bf16[256,784], index: 0, kind: input, shape index: {}]
  %s1 = inlined_call_operand.vmem [shape: bf16[784,128], index: 1, kind: input, shape index: {}]
  %s2 = inlined_call_operand.vmem [shape: f32[1,128], index: 2, kind: input, shape index: {}]
  %s3 = inlined_call_operand.vmem [shape: bf16[128,128], index: 3, kind: input, shape index: {}]
  %s4 = inlined_call_operand.vmem [shape: f32[1,128], index: 4, kind: input, shape index: {}]
  %s5 = inlined_call_operand.vmem [shape: f32[256,128], index: 5, kind: output, shape index: {}]
  %s6 = sld [smem:[#allocation0]]
  $region30: #{mnist_network_forward.1} parent=0
    _
  %s8 = ssub.s32 1, %s6
  %s9 = scalar_select 0, %s8, %s6
  // Predicated region
  $region2: #{mnist_network_forward.1} parent=0 // pred_check
    _
  $region3: #{mnist_network_forward.1} parent=0 // pred_check_branch
    %11 = sbr.rel (0) target = $region5
  $region4: #{mnist_network_forward.1} parent=0 // pred_region
    _
  $region5: #{mnist_network_forward.1} parent=0 // pred_fallthru
    _
  // Predicated region
  $region6: #{mnist_network_forward.1} parent=0 // pred_check
    _
  $region7: #{mnist_network_forward.1} parent=0 // pred_check_branch
    %13 = sbr.rel (0) target = $region9
  $region8: #{mnist_network_forward.1} parent=0 // pred_region
    _
  $region9: #{mnist_network_forward.1} parent=0 // pred_fallthru
    _
  // Predicated region
  $region10: #{mnist_network_forward.1} parent=0 // pred_check
    _
  $region11: #{mnist_network_forward.1} parent=0 // pred_check_branch
    %15 = sbr.rel (0) target = $region13
  $region12: #{mnist_network_forward.1} parent=0 // pred_region
    _
  $region13: #{mnist_network_forward.1} parent=0 // pred_fallthru
    _
  // Predicated region
  $region14: #{mnist_network_forward.1} parent=0 // pred_check
    _
  $region15: #{mnist_network_forward.1} parent=0 // pred_check_branch
    %17 = sbr.rel (0) target = $region17
  $region16: #{mnist_network_forward.1} parent=0 // pred_region
    _
  $region17: #{mnist_network_forward.1} parent=0 // pred_fallthru
    _
  // Predicated region
  $region18: #{mnist_network_forward.1} parent=0 // pred_check
    _
  $region19: #{mnist_network_forward.1} parent=0 // pred_check_branch
    %19 = sbr.rel (0) target = $region21
  $region20: #{mnist_network_forward.1} parent=0 // pred_region
    _
  $region21: #{mnist_network_forward.1} parent=0 // pred_fallthru
    _
  %v21 = vld [vmem:[%s0] sm:$0xff]
  %v22 = vld [vmem:[%s0 + $0x8] sm:$0xff]
  %v23 = vld [vmem:[%s0 + $0x10] sm:$0xff]
  %v24 = vld [vmem:[%s0 + $0x18] sm:$0xf]
  %v25 = vld [vmem:[%s0 + $0x1c] sm:$0xff]
  %v26 = vld [vmem:[%s0 + $0x24] sm:$0xff]
  %v27 = vld [vmem:[%s0 + $0x2c] sm:$0xff]
  %v28 = vld [vmem:[%s0 + $0x34] sm:$0xf]
  %v29 = vld [vmem:[%s0 + $0x38] sm:$0xff]
  %v30 = vld [vmem:[%s0 + $0x40] sm:$0xff]
  %v31 = vld [vmem:[%s0 + $0x48] sm:$0xff]
  %v32 = vld [vmem:[%s0 + $0x50] sm:$0xf]
  %v33 = vld [vmem:[%s0 + $0x54] sm:$0xff]
  %v34 = vld [vmem:[%s0 + $0x5c] sm:$0xff]
  %v35 = vld [vmem:[%s0 + $0x64] sm:$0xff]
  %v36 = vld [vmem:[%s0 + $0x6c] sm:$0xf]
  %v37 = vld [vmem:[%s0 + $0x70] sm:$0xff]
  %v38 = vld [vmem:[%s0 + $0x78] sm:$0xff]
  %v39 = vld [vmem:[%s0 + $0x80] sm:$0xff]
  %v40 = vld [vmem:[%s0 + $0x88] sm:$0xf]
  %v41 = vld [vmem:[%s0 + $0x8c] sm:$0xff]
  %v42 = vld [vmem:[%s0 + $0x94] sm:$0xff]
  %v43 = vld [vmem:[%s0 + $0x9c] sm:$0xff]
  %v44 = vld [vmem:[%s0 + $0xa4] sm:$0xf]
  %v45 = vld [vmem:[%s0 + $0xa8] sm:$0xff]
  %v46 = vld [vmem:[%s0 + $0xb0] sm:$0xff]
  %v47 = vld [vmem:[%s0 + $0xb8] sm:$0xff]
  %v48 = vld [vmem:[%s0 + $0xc0] sm:$0xf]
  %v49 = vld [vmem:[%s0 + $0xc4] sm:$0xff]
  %v50 = vld [vmem:[%s0 + $0xcc] sm:$0xff]
  %v51 = vld [vmem:[%s0 + $0xd4] sm:$0xff]
  %v52 = vld [vmem:[%s0 + $0xdc] sm:$0xf]
  %v53 = vld [vmem:[%s0 + $0xe0] sm:$0xff]
  %v54 = vld [vmem:[%s0 + $0xe8] sm:$0xff]
  %v55 = vld [vmem:[%s0 + $0xf0] sm:$0xff]
  %v56 = vld [vmem:[%s0 + $0xf8] sm:$0xf]
  %v57 = vld [vmem:[%s0 + $0xfc] sm:$0xff]
  %v58 = vld [vmem:[%s0 + $0x104] sm:$0xff]
  %v59 = vld [vmem:[%s0 + $0x10c] sm:$0xff]
  %v60 = vld [vmem:[%s0 + $0x114] sm:$0xf]
  %v61 = vld [vmem:[%s0 + $0x118] sm:$0xff]
  %v62 = vld [vmem:[%s0 + $0x120] sm:$0xff]
  %v63 = vld [vmem:[%s0 + $0x128] sm:$0xff]
  %v64 = vld [vmem:[%s0 + $0x130] sm:$0xf]
  %v65 = vld [vmem:[%s0 + $0x134] sm:$0xff]
  %v66 = vld [vmem:[%s0 + $0x13c] sm:$0xff]
  %v67 = vld [vmem:[%s0 + $0x144] sm:$0xff]
  %v68 = vld [vmem:[%s0 + $0x14c] sm:$0xf]
  %v69 = vld [vmem:[%s0 + $0x150] sm:$0xff]
  %v70 = vld [vmem:[%s0 + $0x158] sm:$0xff]
  %v71 = vld [vmem:[%s0 + $0x160] sm:$0xff]
  %v72 = vld [vmem:[%s0 + $0x168] sm:$0xf]
  %v73 = vld [vmem:[%s0 + $0x16c] sm:$0xff]
  %v74 = vld [vmem:[%s0 + $0x174] sm:$0xff]
  %v75 = vld [vmem:[%s0 + $0x17c] sm:$0xff]
  %v76 = vld [vmem:[%s0 + $0x184] sm:$0xf]
  %v77 = vld [vmem:[%s0 + $0x188] sm:$0xff]
  %v78 = vld [vmem:[%s0 + $0x190] sm:$0xff]
  %v79 = vld [vmem:[%s0 + $0x198] sm:$0xff]
  %v80 = vld [vmem:[%s0 + $0x1a0] sm:$0xf]
  %v81 = vld [vmem:[%s0 + $0x1a4] sm:$0xff]
  %v82 = vld [vmem:[%s0 + $0x1ac] sm:$0xff]
  %v83 = vld [vmem:[%s0 + $0x1b4] sm:$0xff]
  %v84 = vld [vmem:[%s0 + $0x1bc] sm:$0xf]
  %v85 = vld [vmem:[%s0 + $0x1c0] sm:$0xff]
  %v86 = vld [vmem:[%s0 + $0x1c8] sm:$0xff]
  %v87 = vld [vmem:[%s0 + $0x1d0] sm:$0xff]
  %v88 = vld [vmem:[%s0 + $0x1d8] sm:$0xf]
  %v89 = vld [vmem:[%s0 + $0x1dc] sm:$0xff]
  %v90 = vld [vmem:[%s0 + $0x1e4] sm:$0xff]
  %v91 = vld [vmem:[%s0 + $0x1ec] sm:$0xff]
  %v92 = vld [vmem:[%s0 + $0x1f4] sm:$0xf]
  %v93 = vld [vmem:[%s0 + $0x1f8] sm:$0xff]
  %v94 = vld [vmem:[%s0 + $0x200] sm:$0xff]
  %v95 = vld [vmem:[%s0 + $0x208] sm:$0xff]
  %v96 = vld [vmem:[%s0 + $0x210] sm:$0xf]
  %v97 = vld [vmem:[%s0 + $0x214] sm:$0xff]
  %v98 = vld [vmem:[%s0 + $0x21c] sm:$0xff]
  %v99 = vld [vmem:[%s0 + $0x224] sm:$0xff]
  %v100 = vld [vmem:[%s0 + $0x22c] sm:$0xf]
  %v101 = vld [vmem:[%s0 + $0x230] sm:$0xff]
  %v102 = vld [vmem:[%s0 + $0x238] sm:$0xff]
  %v103 = vld [vmem:[%s0 + $0x240] sm:$0xff]
  %v104 = vld [vmem:[%s0 + $0x248] sm:$0xf]
  %v105 = vld [vmem:[%s0 + $0x24c] sm:$0xff]
  %v106 = vld [vmem:[%s0 + $0x254] sm:$0xff]
  %v107 = vld [vmem:[%s0 + $0x25c] sm:$0xff]
  %v108 = vld [vmem:[%s0 + $0x264] sm:$0xf]
  %v109 = vld [vmem:[%s0 + $0x268] sm:$0xff]
  %v110 = vld [vmem:[%s0 + $0x270] sm:$0xff]
  %v111 = vld [vmem:[%s0 + $0x278] sm:$0xff]
  %v112 = vld [vmem:[%s0 + $0x280] sm:$0xf]
  %v113 = vld [vmem:[%s0 + $0x284] sm:$0xff]
  %v114 = vld [vmem:[%s0 + $0x28c] sm:$0xff]
  %v115 = vld [vmem:[%s0 + $0x294] sm:$0xff]
  %v116 = vld [vmem:[%s0 + $0x29c] sm:$0xf]
  %v117 = vld [vmem:[%s0 + $0x2a0] sm:$0xff]
  %v118 = vld [vmem:[%s0 + $0x2a8] sm:$0xff]
  %v119 = vld [vmem:[%s0 + $0x2b0] sm:$0xff]
  %v120 = vld [vmem:[%s0 + $0x2b8] sm:$0xf]
  %v121 = vld [vmem:[%s0 + $0x2bc] sm:$0xff]
  %v122 = vld [vmem:[%s0 + $0x2c4] sm:$0xff]
  %v123 = vld [vmem:[%s0 + $0x2cc] sm:$0xff]
  %v124 = vld [vmem:[%s0 + $0x2d4] sm:$0xf]
  %v125 = vld [vmem:[%s0 + $0x2d8] sm:$0xff]
  %v126 = vld [vmem:[%s0 + $0x2e0] sm:$0xff]
  %v127 = vld [vmem:[%s0 + $0x2e8] sm:$0xff]
  %v128 = vld [vmem:[%s0 + $0x2f0] sm:$0xf]
  %v129 = vld [vmem:[%s0 + $0x2f4] sm:$0xff]
  %v130 = vld [vmem:[%s0 + $0x2fc] sm:$0xff]
  %v131 = vld [vmem:[%s0 + $0x304] sm:$0xff]
  %v132 = vld [vmem:[%s0 + $0x30c] sm:$0xf]
  %v133 = vld [vmem:[%s0 + $0x310] sm:$0xff]
  %v134 = vld [vmem:[%s0 + $0x318] sm:$0xff]
  %v135 = vld [vmem:[%s0 + $0x320] sm:$0xff]
  %v136 = vld [vmem:[%s0 + $0x328] sm:$0xf]
  %v137 = vld [vmem:[%s0 + $0x32c] sm:$0xff]
  %v138 = vld [vmem:[%s0 + $0x334] sm:$0xff]
  %v139 = vld [vmem:[%s0 + $0x33c] sm:$0xff]
  %v140 = vld [vmem:[%s0 + $0x344] sm:$0xf]
  %v141 = vld [vmem:[%s0 + $0x348] sm:$0xff]
  %v142 = vld [vmem:[%s0 + $0x350] sm:$0xff]
  %v143 = vld [vmem:[%s0 + $0x358] sm:$0xff]
  %v144 = vld [vmem:[%s0 + $0x360] sm:$0xf]
  %v145 = vld [vmem:[%s0 + $0x364] sm:$0xff]
  %v146 = vld [vmem:[%s0 + $0x36c] sm:$0xff]
  %v147 = vld [vmem:[%s0 + $0x374] sm:$0xff]
  %v148 = vld [vmem:[%s0 + $0x37c] sm:$0xf]
  %v149 = vld [vmem:[%s1] sm:$0xf]
  %v150 = vld [vmem:[%s1 + $0x4] sm:$0xf]
  %v151 = vld [vmem:[%s1 + $0x8] sm:$0xf]
  %v152 = vld [vmem:[%s1 + $0xc] sm:$0xf]
  %v153 = vld [vmem:[%s1 + $0x10] sm:$0xf]
  %v154 = vld [vmem:[%s1 + $0x14] sm:$0xf]
  %v155 = vld [vmem:[%s1 + $0x18] sm:$0xf]
  %v156 = vld [vmem:[%s1 + $0x1c] sm:$0xf]
  %v157 = vld [vmem:[%s1 + $0x20] sm:$0xf]
  %v158 = vld [vmem:[%s1 + $0x24] sm:$0xf]
  %v159 = vld [vmem:[%s1 + $0x28] sm:$0xf]
  %v160 = vld [vmem:[%s1 + $0x2c] sm:$0xf]
  %v161 = vld [vmem:[%s1 + $0x30] sm:$0xf]
  %v162 = vld [vmem:[%s1 + $0x34] sm:$0xf]
  %v163 = vld [vmem:[%s1 + $0x38] sm:$0xf]
  %v164 = vld [vmem:[%s1 + $0x3c] sm:$0xf]
  %v165 = vld [vmem:[%s1 + $0x40] sm:$0xf]
  %v166 = vld [vmem:[%s1 + $0x44] sm:$0xf]
  %v167 = vld [vmem:[%s1 + $0x48] sm:$0xf]
  %v168 = vld [vmem:[%s1 + $0x4c] sm:$0xf]
  %v169 = vld [vmem:[%s1 + $0x50] sm:$0xf]
  %v170 = vld [vmem:[%s1 + $0x54] sm:$0xf]
  %v171 = vld [vmem:[%s1 + $0x58] sm:$0xf]
  %v172 = vld [vmem:[%s1 + $0x5c] sm:$0xf]
  %v173 = vld [vmem:[%s1 + $0x60] sm:$0xf]
  %v174 = vld [vmem:[%s1 + $0x64] sm:$0xf]
  %v175 = vld [vmem:[%s1 + $0x68] sm:$0xf]
  %v176 = vld [vmem:[%s1 + $0x6c] sm:$0xf]
  %v177 = vld [vmem:[%s1 + $0x70] sm:$0xf]
  %v178 = vld [vmem:[%s1 + $0x74] sm:$0xf]
  %v179 = vld [vmem:[%s1 + $0x78] sm:$0xf]
  %v180 = vld [vmem:[%s1 + $0x7c] sm:$0xf]
  %v181 = vld [vmem:[%s1 + $0x80] sm:$0xf]
  %v182 = vld [vmem:[%s1 + $0x84] sm:$0xf]
  %v183 = vld [vmem:[%s1 + $0x88] sm:$0xf]
  %v184 = vld [vmem:[%s1 + $0x8c] sm:$0xf]
  %v185 = vld [vmem:[%s1 + $0x90] sm:$0xf]
  %v186 = vld [vmem:[%s1 + $0x94] sm:$0xf]
  %v187 = vld [vmem:[%s1 + $0x98] sm:$0xf]
  %v188 = vld [vmem:[%s1 + $0x9c] sm:$0xf]
  %v189 = vld [vmem:[%s1 + $0xa0] sm:$0xf]
  %v190 = vld [vmem:[%s1 + $0xa4] sm:$0xf]
  %v191 = vld [vmem:[%s1 + $0xa8] sm:$0xf]
  %v192 = vld [vmem:[%s1 + $0xac] sm:$0xf]
  %v193 = vld [vmem:[%s1 + $0xb0] sm:$0xf]
  %v194 = vld [vmem:[%s1 + $0xb4] sm:$0xf]
  %v195 = vld [vmem:[%s1 + $0xb8] sm:$0xf]
  %v196 = vld [vmem:[%s1 + $0xbc] sm:$0xf]
  %v197 = vld [vmem:[%s1 + $0xc0] sm:$0xf]
  %v198 = vld [vmem:[%s1 + $0xc4] sm:$0xf]
  %v199 = vld [vmem:[%s1 + $0xc8] sm:$0xf]
  %v200 = vld [vmem:[%s1 + $0xcc] sm:$0xf]
  %v201 = vld [vmem:[%s1 + $0xd0] sm:$0xf]
  %v202 = vld [vmem:[%s1 + $0xd4] sm:$0xf]
  %v203 = vld [vmem:[%s1 + $0xd8] sm:$0xf]
  %v204 = vld [vmem:[%s1 + $0xdc] sm:$0xf]
  %v205 = vld [vmem:[%s1 + $0xe0] sm:$0xf]
  %v206 = vld [vmem:[%s1 + $0xe4] sm:$0xf]
  %v207 = vld [vmem:[%s1 + $0xe8] sm:$0xf]
  %v208 = vld [vmem:[%s1 + $0xec] sm:$0xf]
  %v209 = vld [vmem:[%s1 + $0xf0] sm:$0xf]
  %v210 = vld [vmem:[%s1 + $0xf4] sm:$0xf]
  %v211 = vld [vmem:[%s1 + $0xf8] sm:$0xf]
  %v212 = vld [vmem:[%s1 + $0xfc] sm:$0xf]
  %v213 = vld [vmem:[%s1 + $0x100] sm:$0xf]
  %v214 = vld [vmem:[%s1 + $0x104] sm:$0xf]
  %v215 = vld [vmem:[%s1 + $0x108] sm:$0xf]
  %v216 = vld [vmem:[%s1 + $0x10c] sm:$0xf]
  %v217 = vld [vmem:[%s1 + $0x110] sm:$0xf]
  %v218 = vld [vmem:[%s1 + $0x114] sm:$0xf]
  %v219 = vld [vmem:[%s1 + $0x118] sm:$0xf]
  %v220 = vld [vmem:[%s1 + $0x11c] sm:$0xf]
  %v221 = vld [vmem:[%s1 + $0x120] sm:$0xf]
  %v222 = vld [vmem:[%s1 + $0x124] sm:$0xf]
  %v223 = vld [vmem:[%s1 + $0x128] sm:$0xf]
  %v224 = vld [vmem:[%s1 + $0x12c] sm:$0xf]
  %v225 = vld [vmem:[%s1 + $0x130] sm:$0xf]
  %v226 = vld [vmem:[%s1 + $0x134] sm:$0xf]
  %v227 = vld [vmem:[%s1 + $0x138] sm:$0xf]
  %v228 = vld [vmem:[%s1 + $0x13c] sm:$0xf]
  %v229 = vld [vmem:[%s1 + $0x140] sm:$0xf]
  %v230 = vld [vmem:[%s1 + $0x144] sm:$0xf]
  %v231 = vld [vmem:[%s1 + $0x148] sm:$0xf]
  %v232 = vld [vmem:[%s1 + $0x14c] sm:$0xf]
  %v233 = vld [vmem:[%s1 + $0x150] sm:$0xf]
  %v234 = vld [vmem:[%s1 + $0x154] sm:$0xf]
  %v235 = vld [vmem:[%s1 + $0x158] sm:$0xf]
  %v236 = vld [vmem:[%s1 + $0x15c] sm:$0xf]
  %v237 = vld [vmem:[%s1 + $0x160] sm:$0xf]
  %v238 = vld [vmem:[%s1 + $0x164] sm:$0xf]
  %v239 = vld [vmem:[%s1 + $0x168] sm:$0xf]
  %v240 = vld [vmem:[%s1 + $0x16c] sm:$0xf]
  %v241 = vld [vmem:[%s1 + $0x170] sm:$0xf]
  %v242 = vld [vmem:[%s1 + $0x174] sm:$0xf]
  %v243 = vld [vmem:[%s1 + $0x178] sm:$0xf]
  %v244 = vld [vmem:[%s1 + $0x17c] sm:$0xf]
  %v245 = vld [vmem:[%s1 + $0x180] sm:$0xf]
  %v246 = vld [vmem:[%s1 + $0x184] sm:$0xf]
  %v247 = vld [vmem:[%s2] sm:$0x1]
  %v249 = vperm.slane %v247, 0
  %v379 = vunpack.c.l.b16 %v21
  %v380 = vunpack.c.h.b16 %v21
  %v381 = vunpack.c.l.b16 %v22
  %v382 = vunpack.c.h.b16 %v22
  %v383 = vunpack.c.l.b16 %v23
  %v384 = vunpack.c.h.b16 %v23
  %v385 = vunpack.c.l.b16 %v24
  %v386 = vunpack.c.l.b16 %v25
  %v387 = vunpack.c.h.b16 %v25
  %v388 = vunpack.c.l.b16 %v26
  %v389 = vunpack.c.h.b16 %v26
  %v390 = vunpack.c.l.b16 %v27
  %v391 = vunpack.c.h.b16 %v27
  %v392 = vunpack.c.l.b16 %v28
  %v393 = vunpack.c.l.b16 %v29
  %v394 = vunpack.c.h.b16 %v29
  %v395 = vunpack.c.l.b16 %v30
  %v396 = vunpack.c.h.b16 %v30
  %v397 = vunpack.c.l.b16 %v31
  %v398 = vunpack.c.h.b16 %v31
  %v399 = vunpack.c.l.b16 %v32
  %v400 = vunpack.c.l.b16 %v33
  %v401 = vunpack.c.h.b16 %v33
  %v402 = vunpack.c.l.b16 %v34
  %v403 = vunpack.c.h.b16 %v34
  %v404 = vunpack.c.l.b16 %v35
  %v405 = vunpack.c.h.b16 %v35
  %v406 = vunpack.c.l.b16 %v36
  %v407 = vunpack.c.l.b16 %v37
  %v408 = vunpack.c.h.b16 %v37
  %v409 = vunpack.c.l.b16 %v38
  %v410 = vunpack.c.h.b16 %v38
  %v411 = vunpack.c.l.b16 %v39
  %v412 = vunpack.c.h.b16 %v39
  %v413 = vunpack.c.l.b16 %v40
  %v414 = vunpack.c.l.b16 %v41
  %v415 = vunpack.c.h.b16 %v41
  %v416 = vunpack.c.l.b16 %v42
  %v417 = vunpack.c.h.b16 %v42
  %v418 = vunpack.c.l.b16 %v43
  %v419 = vunpack.c.h.b16 %v43
  %v420 = vunpack.c.l.b16 %v44
  %v421 = vunpack.c.l.b16 %v45
  %v422 = vunpack.c.h.b16 %v45
  %v423 = vunpack.c.l.b16 %v46
  %v424 = vunpack.c.h.b16 %v46
  %v425 = vunpack.c.l.b16 %v47
  %v426 = vunpack.c.h.b16 %v47
  %v427 = vunpack.c.l.b16 %v48
  %v428 = vunpack.c.l.b16 %v49
  %v429 = vunpack.c.h.b16 %v49
  %v430 = vunpack.c.l.b16 %v50
  %v431 = vunpack.c.h.b16 %v50
  %v432 = vunpack.c.l.b16 %v51
  %v433 = vunpack.c.h.b16 %v51
  %v434 = vunpack.c.l.b16 %v52
  %v435 = vunpack.c.l.b16 %v53
  %v436 = vunpack.c.h.b16 %v53
  %v437 = vunpack.c.l.b16 %v54
  %v438 = vunpack.c.h.b16 %v54
  %v439 = vunpack.c.l.b16 %v55
  %v440 = vunpack.c.h.b16 %v55
  %v441 = vunpack.c.l.b16 %v56
  %v442 = vunpack.c.l.b16 %v57
  %v443 = vunpack.c.h.b16 %v57
  %v444 = vunpack.c.l.b16 %v58
  %v445 = vunpack.c.h.b16 %v58
  %v446 = vunpack.c.l.b16 %v59
  %v447 = vunpack.c.h.b16 %v59
  %v448 = vunpack.c.l.b16 %v60
  %v449 = vunpack.c.l.b16 %v61
  %v450 = vunpack.c.h.b16 %v61
  %v451 = vunpack.c.l.b16 %v62
  %v452 = vunpack.c.h.b16 %v62
  %v453 = vunpack.c.l.b16 %v63
  %v454 = vunpack.c.h.b16 %v63
  %v455 = vunpack.c.l.b16 %v64
  %v456 = vunpack.c.l.b16 %v65
  %v457 = vunpack.c.h.b16 %v65
  %v458 = vunpack.c.l.b16 %v66
  %v459 = vunpack.c.h.b16 %v66
  %v460 = vunpack.c.l.b16 %v67
  %v461 = vunpack.c.h.b16 %v67
  %v462 = vunpack.c.l.b16 %v68
  %v463 = vunpack.c.l.b16 %v69
  %v464 = vunpack.c.h.b16 %v69
  %v465 = vunpack.c.l.b16 %v70
  %v466 = vunpack.c.h.b16 %v70
  %v467 = vunpack.c.l.b16 %v71
  %v468 = vunpack.c.h.b16 %v71
  %v469 = vunpack.c.l.b16 %v72
  %v470 = vunpack.c.l.b16 %v73
  %v471 = vunpack.c.h.b16 %v73
  %v472 = vunpack.c.l.b16 %v74
  %v473 = vunpack.c.h.b16 %v74
  %v474 = vunpack.c.l.b16 %v75
  %v475 = vunpack.c.h.b16 %v75
  %v476 = vunpack.c.l.b16 %v76
  %v477 = vunpack.c.l.b16 %v77
  %v478 = vunpack.c.h.b16 %v77
  %v479 = vunpack.c.l.b16 %v78
  %v480 = vunpack.c.h.b16 %v78
  %v481 = vunpack.c.l.b16 %v79
  %v482 = vunpack.c.h.b16 %v79
  %v483 = vunpack.c.l.b16 %v80
  %v484 = vunpack.c.l.b16 %v81
  %v485 = vunpack.c.h.b16 %v81
  %v486 = vunpack.c.l.b16 %v82
  %v487 = vunpack.c.h.b16 %v82
  %v488 = vunpack.c.l.b16 %v83
  %v489 = vunpack.c.h.b16 %v83
  %v490 = vunpack.c.l.b16 %v84
  %v491 = vunpack.c.l.b16 %v85
  %v492 = vunpack.c.h.b16 %v85
  %v493 = vunpack.c.l.b16 %v86
  %v494 = vunpack.c.h.b16 %v86
  %v495 = vunpack.c.l.b16 %v87
  %v496 = vunpack.c.h.b16 %v87
  %v497 = vunpack.c.l.b16 %v88
  %v498 = vunpack.c.l.b16 %v89
  %v499 = vunpack.c.h.b16 %v89
  %v500 = vunpack.c.l.b16 %v90
  %v501 = vunpack.c.h.b16 %v90
  %v502 = vunpack.c.l.b16 %v91
  %v503 = vunpack.c.h.b16 %v91
  %v504 = vunpack.c.l.b16 %v92
  %v505 = vunpack.c.l.b16 %v93
  %v506 = vunpack.c.h.b16 %v93
  %v507 = vunpack.c.l.b16 %v94
  %v508 = vunpack.c.h.b16 %v94
  %v509 = vunpack.c.l.b16 %v95
  %v510 = vunpack.c.h.b16 %v95
  %v511 = vunpack.c.l.b16 %v96
  %v512 = vunpack.c.l.b16 %v97
  %v513 = vunpack.c.h.b16 %v97
  %v514 = vunpack.c.l.b16 %v98
  %v515 = vunpack.c.h.b16 %v98
  %v516 = vunpack.c.l.b16 %v99
  %v517 = vunpack.c.h.b16 %v99
  %v518 = vunpack.c.l.b16 %v100
  %v519 = vunpack.c.l.b16 %v101
  %v520 = vunpack.c.h.b16 %v101
  %v521 = vunpack.c.l.b16 %v102
  %v522 = vunpack.c.h.b16 %v102
  %v523 = vunpack.c.l.b16 %v103
  %v524 = vunpack.c.h.b16 %v103
  %v525 = vunpack.c.l.b16 %v104
  %v526 = vunpack.c.l.b16 %v105
  %v527 = vunpack.c.h.b16 %v105
  %v528 = vunpack.c.l.b16 %v106
  %v529 = vunpack.c.h.b16 %v106
  %v530 = vunpack.c.l.b16 %v107
  %v531 = vunpack.c.h.b16 %v107
  %v532 = vunpack.c.l.b16 %v108
  %v533 = vunpack.c.l.b16 %v109
  %v534 = vunpack.c.h.b16 %v109
  %v535 = vunpack.c.l.b16 %v110
  %v536 = vunpack.c.h.b16 %v110
  %v537 = vunpack.c.l.b16 %v111
  %v538 = vunpack.c.h.b16 %v111
  %v539 = vunpack.c.l.b16 %v112
  %v540 = vunpack.c.l.b16 %v113
  %v541 = vunpack.c.h.b16 %v113
  %v542 = vunpack.c.l.b16 %v114
  %v543 = vunpack.c.h.b16 %v114
  %v544 = vunpack.c.l.b16 %v115
  %v545 = vunpack.c.h.b16 %v115
  %v546 = vunpack.c.l.b16 %v116
  %v547 = vunpack.c.l.b16 %v117
  %v548 = vunpack.c.h.b16 %v117
  %v549 = vunpack.c.l.b16 %v118
  %v550 = vunpack.c.h.b16 %v118
  %v551 = vunpack.c.l.b16 %v119
  %v552 = vunpack.c.h.b16 %v119
  %v553 = vunpack.c.l.b16 %v120
  %v554 = vunpack.c.l.b16 %v121
  %v555 = vunpack.c.h.b16 %v121
  %v556 = vunpack.c.l.b16 %v122
  %v557 = vunpack.c.h.b16 %v122
  %v558 = vunpack.c.l.b16 %v123
  %v559 = vunpack.c.h.b16 %v123
  %v560 = vunpack.c.l.b16 %v124
  %v561 = vunpack.c.l.b16 %v125
  %v562 = vunpack.c.h.b16 %v125
  %v563 = vunpack.c.l.b16 %v126
  %v564 = vunpack.c.h.b16 %v126
  %v565 = vunpack.c.l.b16 %v127
  %v566 = vunpack.c.h.b16 %v127
  %v567 = vunpack.c.l.b16 %v128
  %v568 = vunpack.c.l.b16 %v129
  %v569 = vunpack.c.h.b16 %v129
  %v570 = vunpack.c.l.b16 %v130
  %v571 = vunpack.c.h.b16 %v130
  %v572 = vunpack.c.l.b16 %v131
  %v573 = vunpack.c.h.b16 %v131
  %v574 = vunpack.c.l.b16 %v132
  %v575 = vunpack.c.l.b16 %v133
  %v576 = vunpack.c.h.b16 %v133
  %v577 = vunpack.c.l.b16 %v134
  %v578 = vunpack.c.h.b16 %v134
  %v579 = vunpack.c.l.b16 %v135
  %v580 = vunpack.c.h.b16 %v135
  %v581 = vunpack.c.l.b16 %v136
  %v582 = vunpack.c.l.b16 %v137
  %v583 = vunpack.c.h.b16 %v137
  %v584 = vunpack.c.l.b16 %v138
  %v585 = vunpack.c.h.b16 %v138
  %v586 = vunpack.c.l.b16 %v139
  %v587 = vunpack.c.h.b16 %v139
  %v588 = vunpack.c.l.b16 %v140
  %v589 = vunpack.c.l.b16 %v141
  %v590 = vunpack.c.h.b16 %v141
  %v591 = vunpack.c.l.b16 %v142
  %v592 = vunpack.c.h.b16 %v142
  %v593 = vunpack.c.l.b16 %v143
  %v594 = vunpack.c.h.b16 %v143
  %v595 = vunpack.c.l.b16 %v144
  %v596 = vunpack.c.l.b16 %v145
  %v597 = vunpack.c.h.b16 %v145
  %v598 = vunpack.c.l.b16 %v146
  %v599 = vunpack.c.h.b16 %v146
  %v600 = vunpack.c.l.b16 %v147
  %v601 = vunpack.c.h.b16 %v147
  %v602 = vunpack.c.l.b16 %v148
  %v603 = vpack.c.b16 %v386, %v379
  %v604 = vpack.c.b16 %v387, %v380
  %v605 = vpack.c.b16 %v388, %v381
  %v606 = vpack.c.b16 %v389, %v382
  %v607 = vpack.c.b16 %v390, %v383
  %v608 = vpack.c.b16 %v391, %v384
  %v609 = vpack.c.b16 %v392, %v385
  %v610 = vpack.c.b16 %v400, %v393
  %v611 = vpack.c.b16 %v401, %v394
  %v612 = vpack.c.b16 %v402, %v395
  %v613 = vpack.c.b16 %v403, %v396
  %v614 = vpack.c.b16 %v404, %v397
  %v615 = vpack.c.b16 %v405, %v398
  %v616 = vpack.c.b16 %v406, %v399
  %v617 = vpack.c.b16 %v414, %v407
  %v618 = vpack.c.b16 %v415, %v408
  %v619 = vpack.c.b16 %v416, %v409
  %v620 = vpack.c.b16 %v417, %v410
  %v621 = vpack.c.b16 %v418, %v411
  %v622 = vpack.c.b16 %v419, %v412
  %v623 = vpack.c.b16 %v420, %v413
  %v624 = vpack.c.b16 %v428, %v421
  %v625 = vpack.c.b16 %v429, %v422
  %v626 = vpack.c.b16 %v430, %v423
  %v627 = vpack.c.b16 %v431, %v424
  %v628 = vpack.c.b16 %v432, %v425
  %v629 = vpack.c.b16 %v433, %v426
  %v630 = vpack.c.b16 %v434, %v427
  %v631 = vpack.c.b16 %v442, %v435
  %v632 = vpack.c.b16 %v443, %v436
  %v633 = vpack.c.b16 %v444, %v437
  %v634 = vpack.c.b16 %v445, %v438
  %v635 = vpack.c.b16 %v446, %v439
  %v636 = vpack.c.b16 %v447, %v440
  %v637 = vpack.c.b16 %v448, %v441
  %v638 = vpack.c.b16 %v456, %v449
  %v639 = vpack.c.b16 %v457, %v450
  %v640 = vpack.c.b16 %v458, %v451
  %v641 = vpack.c.b16 %v459, %v452
  %v642 = vpack.c.b16 %v460, %v453
  %v643 = vpack.c.b16 %v461, %v454
  %v644 = vpack.c.b16 %v462, %v455
  %v645 = vpack.c.b16 %v470, %v463
  %v646 = vpack.c.b16 %v471, %v464
  %v647 = vpack.c.b16 %v472, %v465
  %v648 = vpack.c.b16 %v473, %v466
  %v649 = vpack.c.b16 %v474, %v467
  %v650 = vpack.c.b16 %v475, %v468
  %v651 = vpack.c.b16 %v476, %v469
  %v652 = vpack.c.b16 %v484, %v477
  %v653 = vpack.c.b16 %v485, %v478
  %v654 = vpack.c.b16 %v486, %v479
  %v655 = vpack.c.b16 %v487, %v480
  %v656 = vpack.c.b16 %v488, %v481
  %v657 = vpack.c.b16 %v489, %v482
  %v658 = vpack.c.b16 %v490, %v483
  %v659 = vpack.c.b16 %v498, %v491
  %v660 = vpack.c.b16 %v499, %v492
  %v661 = vpack.c.b16 %v500, %v493
  %v662 = vpack.c.b16 %v501, %v494
  %v663 = vpack.c.b16 %v502, %v495
  %v664 = vpack.c.b16 %v503, %v496
  %v665 = vpack.c.b16 %v504, %v497
  %v666 = vpack.c.b16 %v512, %v505
  %v667 = vpack.c.b16 %v513, %v506
  %v668 = vpack.c.b16 %v514, %v507
  %v669 = vpack.c.b16 %v515, %v508
  %v670 = vpack.c.b16 %v516, %v509
  %v671 = vpack.c.b16 %v517, %v510
  %v672 = vpack.c.b16 %v518, %v511
  %v673 = vpack.c.b16 %v526, %v519
  %v674 = vpack.c.b16 %v527, %v520
  %v675 = vpack.c.b16 %v528, %v521
  %v676 = vpack.c.b16 %v529, %v522
  %v677 = vpack.c.b16 %v530, %v523
  %v678 = vpack.c.b16 %v531, %v524
  %v679 = vpack.c.b16 %v532, %v525
  %v680 = vpack.c.b16 %v540, %v533
  %v681 = vpack.c.b16 %v541, %v534
  %v682 = vpack.c.b16 %v542, %v535
  %v683 = vpack.c.b16 %v543, %v536
  %v684 = vpack.c.b16 %v544, %v537
  %v685 = vpack.c.b16 %v545, %v538
  %v686 = vpack.c.b16 %v546, %v539
  %v687 = vpack.c.b16 %v554, %v547
  %v688 = vpack.c.b16 %v555, %v548
  %v689 = vpack.c.b16 %v556, %v549
  %v690 = vpack.c.b16 %v557, %v550
  %v691 = vpack.c.b16 %v558, %v551
  %v692 = vpack.c.b16 %v559, %v552
  %v693 = vpack.c.b16 %v560, %v553
  %v694 = vpack.c.b16 %v568, %v561
  %v695 = vpack.c.b16 %v569, %v562
  %v696 = vpack.c.b16 %v570, %v563
  %v697 = vpack.c.b16 %v571, %v564
  %v698 = vpack.c.b16 %v572, %v565
  %v699 = vpack.c.b16 %v573, %v566
  %v700 = vpack.c.b16 %v574, %v567
  %v701 = vpack.c.b16 %v582, %v575
  %v702 = vpack.c.b16 %v583, %v576
  %v703 = vpack.c.b16 %v584, %v577
  %v704 = vpack.c.b16 %v585, %v578
  %v705 = vpack.c.b16 %v586, %v579
  %v706 = vpack.c.b16 %v587, %v580
  %v707 = vpack.c.b16 %v588, %v581
  %v708 = vpack.c.b16 %v596, %v589
  %v709 = vpack.c.b16 %v597, %v590
  %v710 = vpack.c.b16 %v598, %v591
  %v711 = vpack.c.b16 %v599, %v592
  %v712 = vpack.c.b16 %v600, %v593
  %v713 = vpack.c.b16 %v601, %v594
  %v714 = vpack.c.b16 %v602, %v595
  %v909 = vunpack.c.l.b16 %v149
  %v910 = vunpack.c.l.b16 %v150
  %v911 = vunpack.c.l.b16 %v151
  %v912 = vunpack.c.l.b16 %v152
  %v913 = vunpack.c.l.b16 %v153
  %v914 = vunpack.c.l.b16 %v154
  %v915 = vunpack.c.l.b16 %v155
  %v916 = vunpack.c.l.b16 %v156
  %v917 = vunpack.c.l.b16 %v157
  %v918 = vunpack.c.l.b16 %v158
  %v919 = vunpack.c.l.b16 %v159
  %v920 = vunpack.c.l.b16 %v160
  %v921 = vunpack.c.l.b16 %v161
  %v922 = vunpack.c.l.b16 %v162
  %v923 = vunpack.c.l.b16 %v163
  %v924 = vunpack.c.l.b16 %v164
  %v925 = vunpack.c.l.b16 %v165
  %v926 = vunpack.c.l.b16 %v166
  %v927 = vunpack.c.l.b16 %v167
  %v928 = vunpack.c.l.b16 %v168
  %v929 = vunpack.c.l.b16 %v169
  %v930 = vunpack.c.l.b16 %v170
  %v931 = vunpack.c.l.b16 %v171
  %v932 = vunpack.c.l.b16 %v172
  %v933 = vunpack.c.l.b16 %v173
  %v934 = vunpack.c.l.b16 %v174
  %v935 = vunpack.c.l.b16 %v175
  %v936 = vunpack.c.l.b16 %v176
  %v937 = vunpack.c.l.b16 %v177
  %v938 = vunpack.c.l.b16 %v178
  %v939 = vunpack.c.l.b16 %v179
  %v940 = vunpack.c.l.b16 %v180
  %v941 = vunpack.c.l.b16 %v181
  %v942 = vunpack.c.l.b16 %v182
  %v943 = vunpack.c.l.b16 %v183
  %v944 = vunpack.c.l.b16 %v184
  %v945 = vunpack.c.l.b16 %v185
  %v946 = vunpack.c.l.b16 %v186
  %v947 = vunpack.c.l.b16 %v187
  %v948 = vunpack.c.l.b16 %v188
  %v949 = vunpack.c.l.b16 %v189
  %v950 = vunpack.c.l.b16 %v190
  %v951 = vunpack.c.l.b16 %v191
  %v952 = vunpack.c.l.b16 %v192
  %v953 = vunpack.c.l.b16 %v193
  %v954 = vunpack.c.l.b16 %v194
  %v955 = vunpack.c.l.b16 %v195
  %v956 = vunpack.c.l.b16 %v196
  %v957 = vunpack.c.l.b16 %v197
  %v958 = vunpack.c.l.b16 %v198
  %v959 = vunpack.c.l.b16 %v199
  %v960 = vunpack.c.l.b16 %v200
  %v961 = vunpack.c.l.b16 %v201
  %v962 = vunpack.c.l.b16 %v202
  %v963 = vunpack.c.l.b16 %v203
  %v964 = vunpack.c.l.b16 %v204
  %v965 = vunpack.c.l.b16 %v205
  %v966 = vunpack.c.l.b16 %v206
  %v967 = vunpack.c.l.b16 %v207
  %v968 = vunpack.c.l.b16 %v208
  %v969 = vunpack.c.l.b16 %v209
  %v970 = vunpack.c.l.b16 %v210
  %v971 = vunpack.c.l.b16 %v211
  %v972 = vunpack.c.l.b16 %v212
  %v973 = vunpack.c.l.b16 %v213
  %v974 = vunpack.c.l.b16 %v214
  %v975 = vunpack.c.l.b16 %v215
  %v976 = vunpack.c.l.b16 %v216
  %v977 = vunpack.c.l.b16 %v217
  %v978 = vunpack.c.l.b16 %v218
  %v979 = vunpack.c.l.b16 %v219
  %v980 = vunpack.c.l.b16 %v220
  %v981 = vunpack.c.l.b16 %v221
  %v982 = vunpack.c.l.b16 %v222
  %v983 = vunpack.c.l.b16 %v223
  %v984 = vunpack.c.l.b16 %v224
  %v985 = vunpack.c.l.b16 %v225
  %v986 = vunpack.c.l.b16 %v226
  %v987 = vunpack.c.l.b16 %v227
  %v988 = vunpack.c.l.b16 %v228
  %v989 = vunpack.c.l.b16 %v229
  %v990 = vunpack.c.l.b16 %v230
  %v991 = vunpack.c.l.b16 %v231
  %v992 = vunpack.c.l.b16 %v232
  %v993 = vunpack.c.l.b16 %v233
  %v994 = vunpack.c.l.b16 %v234
  %v995 = vunpack.c.l.b16 %v235
  %v996 = vunpack.c.l.b16 %v236
  %v997 = vunpack.c.l.b16 %v237
  %v998 = vunpack.c.l.b16 %v238
  %v999 = vunpack.c.l.b16 %v239
  %v1000 = vunpack.c.l.b16 %v240
  %v1001 = vunpack.c.l.b16 %v241
  %v1002 = vunpack.c.l.b16 %v242
  %v1003 = vunpack.c.l.b16 %v243
  %v1004 = vunpack.c.l.b16 %v244
  %v1005 = vunpack.c.l.b16 %v245
  %v1006 = vunpack.c.l.b16 %v246
  %v1007 = vpack.c.b16 %v910, %v909
  %v1008 = vpack.c.b16 %v912, %v911
  %v1009 = vpack.c.b16 %v914, %v913
  %v1010 = vpack.c.b16 %v916, %v915
  %v1011 = vpack.c.b16 %v918, %v917
  %v1012 = vpack.c.b16 %v920, %v919
  %v1013 = vpack.c.b16 %v922, %v921
  %v1014 = vpack.c.b16 %v924, %v923
  %v1015 = vpack.c.b16 %v926, %v925
  %v1016 = vpack.c.b16 %v928, %v927
  %v1017 = vpack.c.b16 %v930, %v929
  %v1018 = vpack.c.b16 %v932, %v931
  %v1019 = vpack.c.b16 %v934, %v933
  %v1020 = vpack.c.b16 %v936, %v935
  %v1021 = vpack.c.b16 %v938, %v937
  %v1022 = vpack.c.b16 %v940, %v939
  %v1023 = vpack.c.b16 %v942, %v941
  %v1024 = vpack.c.b16 %v944, %v943
  %v1025 = vpack.c.b16 %v946, %v945
  %v1026 = vpack.c.b16 %v948, %v947
  %v1027 = vpack.c.b16 %v950, %v949
  %v1028 = vpack.c.b16 %v952, %v951
  %v1029 = vpack.c.b16 %v954, %v953
  %v1030 = vpack.c.b16 %v956, %v955
  %v1031 = vpack.c.b16 %v958, %v957
  %v1032 = vpack.c.b16 %v960, %v959
  %v1033 = vpack.c.b16 %v962, %v961
  %v1034 = vpack.c.b16 %v964, %v963
  %v1035 = vpack.c.b16 %v966, %v965
  %v1036 = vpack.c.b16 %v968, %v967
  %v1037 = vpack.c.b16 %v970, %v969
  %v1038 = vpack.c.b16 %v972, %v971
  %v1039 = vpack.c.b16 %v974, %v973
  %v1040 = vpack.c.b16 %v976, %v975
  %v1041 = vpack.c.b16 %v978, %v977
  %v1042 = vpack.c.b16 %v980, %v979
  %v1043 = vpack.c.b16 %v982, %v981
  %v1044 = vpack.c.b16 %v984, %v983
  %v1045 = vpack.c.b16 %v986, %v985
  %v1046 = vpack.c.b16 %v988, %v987
  %v1047 = vpack.c.b16 %v990, %v989
  %v1048 = vpack.c.b16 %v992, %v991
  %v1049 = vpack.c.b16 %v994, %v993
  %v1050 = vpack.c.b16 %v996, %v995
  %v1051 = vpack.c.b16 %v998, %v997
  %v1052 = vpack.c.b16 %v1000, %v999
  %v1053 = vpack.c.b16 %v1002, %v1001
  %v1054 = vpack.c.b16 %v1004, %v1003
  %v1055 = vpack.c.b16 %v1006, %v1005
  %vm1105 = vcmask 130048
  %v1107 = vsel %vm1105, %v609, 0
  %v1110 = vsel %vm1105, %v616, 0
  %v1113 = vsel %vm1105, %v623, 0
  %v1116 = vsel %vm1105, %v630, 0
  %v1119 = vsel %vm1105, %v637, 0
  %v1122 = vsel %vm1105, %v644, 0
  %v1125 = vsel %vm1105, %v651, 0
  %v1128 = vsel %vm1105, %v658, 0
  %v1131 = vsel %vm1105, %v665, 0
  %v1134 = vsel %vm1105, %v672, 0
  %v1137 = vsel %vm1105, %v679, 0
  %v1140 = vsel %vm1105, %v686, 0
  %v1143 = vsel %vm1105, %v693, 0
  %v1146 = vsel %vm1105, %v700, 0
  %v1149 = vsel %vm1105, %v707, 0
  %v1152 = vsel %vm1105, %v714, 0
  %1154 = vmatpush.bf16.msra.mxu0 %v1014
  %1155 = vmatpush.bf16.msra.mxu0 %v1013
  %1156 = vmatpush.bf16.msra.mxu0 %v1012
  %1157 = vmatpush.bf16.msra.mxu0 %v1011
  %1158 = vmatpush.bf16.msra.mxu0 %v1010
  %1159 = vmatpush.bf16.msra.mxu0 %v1009
  %1160 = vmatpush.bf16.msra.mxu0 %v1008
  %1161 = vmatpush.bf16.msra.mxu0 %v1007
  %1162 = vmatmul.bf16.gmra.mxu0 %v603
  %v1163 = vpop.f32.mrf.mxu0
  %v1164 = vadd.f32 %v249, %v1163
  %v1165 = vpop.f32.mrf.mxu0
  %v1166 = vadd.f32 %v249, %v1165
  %1167 = vmatmul.bf16.gmra.mxu0 %v610
  %v1168 = vpop.f32.mrf.mxu0
  %v1169 = vadd.f32 %v249, %v1168
  %v1170 = vpop.f32.mrf.mxu0
  %v1171 = vadd.f32 %v249, %v1170
  %1172 = vmatmul.bf16.gmra.mxu0 %v617
  %v1173 = vpop.f32.mrf.mxu0
  %v1174 = vadd.f32 %v249, %v1173
  %v1175 = vpop.f32.mrf.mxu0
  %v1176 = vadd.f32 %v249, %v1175
  %1177 = vmatmul.bf16.gmra.mxu0 %v624
  %v1178 = vpop.f32.mrf.mxu0
  %v1179 = vadd.f32 %v249, %v1178
  %v1180 = vpop.f32.mrf.mxu0
  %v1181 = vadd.f32 %v249, %v1180
  %1182 = vmatmul.bf16.gmra.mxu0 %v631
  %v1183 = vpop.f32.mrf.mxu0
  %v1184 = vadd.f32 %v249, %v1183
  %v1185 = vpop.f32.mrf.mxu0
  %v1186 = vadd.f32 %v249, %v1185
  %1187 = vmatmul.bf16.gmra.mxu0 %v638
  %v1188 = vpop.f32.mrf.mxu0
  %v1189 = vadd.f32 %v249, %v1188
  %v1190 = vpop.f32.mrf.mxu0
  %v1191 = vadd.f32 %v249, %v1190
  %1192 = vmatmul.bf16.gmra.mxu0 %v645
  %v1193 = vpop.f32.mrf.mxu0
  %v1194 = vadd.f32 %v249, %v1193
  %v1195 = vpop.f32.mrf.mxu0
  %v1196 = vadd.f32 %v249, %v1195
  %1197 = vmatmul.bf16.gmra.mxu0 %v652
  %v1198 = vpop.f32.mrf.mxu0
  %v1199 = vadd.f32 %v249, %v1198
  %v1200 = vpop.f32.mrf.mxu0
  %v1201 = vadd.f32 %v249, %v1200
  %1202 = vmatmul.bf16.gmra.mxu0 %v659
  %v1203 = vpop.f32.mrf.mxu0
  %v1204 = vadd.f32 %v249, %v1203
  %v1205 = vpop.f32.mrf.mxu0
  %v1206 = vadd.f32 %v249, %v1205
  %1207 = vmatmul.bf16.gmra.mxu0 %v666
  %v1208 = vpop.f32.mrf.mxu0
  %v1209 = vadd.f32 %v249, %v1208
  %v1210 = vpop.f32.mrf.mxu0
  %v1211 = vadd.f32 %v249, %v1210
  %1212 = vmatmul.bf16.gmra.mxu0 %v673
  %v1213 = vpop.f32.mrf.mxu0
  %v1214 = vadd.f32 %v249, %v1213
  %v1215 = vpop.f32.mrf.mxu0
  %v1216 = vadd.f32 %v249, %v1215
  %1217 = vmatmul.bf16.gmra.mxu0 %v680
  %v1218 = vpop.f32.mrf.mxu0
  %v1219 = vadd.f32 %v249, %v1218
  %v1220 = vpop.f32.mrf.mxu0
  %v1221 = vadd.f32 %v249, %v1220
  %1222 = vmatmul.bf16.gmra.mxu0 %v687
  %v1223 = vpop.f32.mrf.mxu0
  %v1224 = vadd.f32 %v249, %v1223
  %v1225 = vpop.f32.mrf.mxu0
  %v1226 = vadd.f32 %v249, %v1225
  %1227 = vmatmul.bf16.gmra.mxu0 %v694
  %v1228 = vpop.f32.mrf.mxu0
  %v1229 = vadd.f32 %v249, %v1228
  %v1230 = vpop.f32.mrf.mxu0
  %v1231 = vadd.f32 %v249, %v1230
  %1232 = vmatmul.bf16.gmra.mxu0 %v701
  %v1233 = vpop.f32.mrf.mxu0
  %v1234 = vadd.f32 %v249, %v1233
  %v1235 = vpop.f32.mrf.mxu0
  %v1236 = vadd.f32 %v249, %v1235
  %1237 = vmatmul.bf16.gmra.mxu0 %v708
  %v1238 = vpop.f32.mrf.mxu0
  %v1239 = vadd.f32 %v249, %v1238
  %v1240 = vpop.f32.mrf.mxu0
  %v1241 = vadd.f32 %v249, %v1240
  %1242 = vdwg.mxu0
  %1243 = vmatpush.bf16.msra.mxu0 %v1022
  %1244 = vmatpush.bf16.msra.mxu0 %v1021
  %1245 = vmatpush.bf16.msra.mxu0 %v1020
  %1246 = vmatpush.bf16.msra.mxu0 %v1019
  %1247 = vmatpush.bf16.msra.mxu0 %v1018
  %1248 = vmatpush.bf16.msra.mxu0 %v1017
  %1249 = vmatpush.bf16.msra.mxu0 %v1016
  %1250 = vmatpush.bf16.msra.mxu0 %v1015
  %1251 = vmatmul.bf16.gmra.mxu0 %v604
  %v1252 = vpop.f32.mrf.mxu0
  %v1253 = vadd.f32 %v1164, %v1252
  %v1254 = vpop.f32.mrf.mxu0
  %v1255 = vadd.f32 %v1166, %v1254
  %1256 = vmatmul.bf16.gmra.mxu0 %v611
  %v1257 = vpop.f32.mrf.mxu0
  %v1258 = vadd.f32 %v1169, %v1257
  %v1259 = vpop.f32.mrf.mxu0
  %v1260 = vadd.f32 %v1171, %v1259
  %1261 = vmatmul.bf16.gmra.mxu0 %v618
  %v1262 = vpop.f32.mrf.mxu0
  %v1263 = vadd.f32 %v1174, %v1262
  %v1264 = vpop.f32.mrf.mxu0
  %v1265 = vadd.f32 %v1176, %v1264
  %1266 = vmatmul.bf16.gmra.mxu0 %v625
  %v1267 = vpop.f32.mrf.mxu0
  %v1268 = vadd.f32 %v1179, %v1267
  %v1269 = vpop.f32.mrf.mxu0
  %v1270 = vadd.f32 %v1181, %v1269
  %1271 = vmatmul.bf16.gmra.mxu0 %v632
  %v1272 = vpop.f32.mrf.mxu0
  %v1273 = vadd.f32 %v1184, %v1272
  %v1274 = vpop.f32.mrf.mxu0
  %v1275 = vadd.f32 %v1186, %v1274
  %1276 = vmatmul.bf16.gmra.mxu0 %v639
  %v1277 = vpop.f32.mrf.mxu0
  %v1278 = vadd.f32 %v1189, %v1277
  %v1279 = vpop.f32.mrf.mxu0
  %v1280 = vadd.f32 %v1191, %v1279
  %1281 = vmatmul.bf16.gmra.mxu0 %v646
  %v1282 = vpop.f32.mrf.mxu0
  %v1283 = vadd.f32 %v1194, %v1282
  %v1284 = vpop.f32.mrf.mxu0
  %v1285 = vadd.f32 %v1196, %v1284
  %1286 = vmatmul.bf16.gmra.mxu0 %v653
  %v1287 = vpop.f32.mrf.mxu0
  %v1288 = vadd.f32 %v1199, %v1287
  %v1289 = vpop.f32.mrf.mxu0
  %v1290 = vadd.f32 %v1201, %v1289
  %1291 = vmatmul.bf16.gmra.mxu0 %v660
  %v1292 = vpop.f32.mrf.mxu0
  %v1293 = vadd.f32 %v1204, %v1292
  %v1294 = vpop.f32.mrf.mxu0
  %v1295 = vadd.f32 %v1206, %v1294
  %1296 = vmatmul.bf16.gmra.mxu0 %v667
  %v1297 = vpop.f32.mrf.mxu0
  %v1298 = vadd.f32 %v1209, %v1297
  %v1299 = vpop.f32.mrf.mxu0
  %v1300 = vadd.f32 %v1211, %v1299
  %1301 = vmatmul.bf16.gmra.mxu0 %v674
  %v1302 = vpop.f32.mrf.mxu0
  %v1303 = vadd.f32 %v1214, %v1302
  %v1304 = vpop.f32.mrf.mxu0
  %v1305 = vadd.f32 %v1216, %v1304
  %1306 = vmatmul.bf16.gmra.mxu0 %v681
  %v1307 = vpop.f32.mrf.mxu0
  %v1308 = vadd.f32 %v1219, %v1307
  %v1309 = vpop.f32.mrf.mxu0
  %v1310 = vadd.f32 %v1221, %v1309
  %1311 = vmatmul.bf16.gmra.mxu0 %v688
  %v1312 = vpop.f32.mrf.mxu0
  %v1313 = vadd.f32 %v1224, %v1312
  %v1314 = vpop.f32.mrf.mxu0
  %v1315 = vadd.f32 %v1226, %v1314
  %1316 = vmatmul.bf16.gmra.mxu0 %v695
  %v1317 = vpop.f32.mrf.mxu0
  %v1318 = vadd.f32 %v1229, %v1317
  %v1319 = vpop.f32.mrf.mxu0
  %v1320 = vadd.f32 %v1231, %v1319
  %1321 = vmatmul.bf16.gmra.mxu0 %v702
  %v1322 = vpop.f32.mrf.mxu0
  %v1323 = vadd.f32 %v1234, %v1322
  %v1324 = vpop.f32.mrf.mxu0
  %v1325 = vadd.f32 %v1236, %v1324
  %1326 = vmatmul.bf16.gmra.mxu0 %v709
  %v1327 = vpop.f32.mrf.mxu0
  %v1328 = vadd.f32 %v1239, %v1327
  %v1329 = vpop.f32.mrf.mxu0
  %v1330 = vadd.f32 %v1241, %v1329
  %1331 = vdwg.mxu0
  %1332 = vmatpush.bf16.msra.mxu0 %v1030
  %1333 = vmatpush.bf16.msra.mxu0 %v1029
  %1334 = vmatpush.bf16.msra.mxu0 %v1028
  %1335 = vmatpush.bf16.msra.mxu0 %v1027
  %1336 = vmatpush.bf16.msra.mxu0 %v1026
  %1337 = vmatpush.bf16.msra.mxu0 %v1025
  %1338 = vmatpush.bf16.msra.mxu0 %v1024
  %1339 = vmatpush.bf16.msra.mxu0 %v1023
  %1340 = vmatmul.bf16.gmra.mxu0 %v605
  %v1341 = vpop.f32.mrf.mxu0
  %v1342 = vadd.f32 %v1253, %v1341
  %v1343 = vpop.f32.mrf.mxu0
  %v1344 = vadd.f32 %v1255, %v1343
  %1345 = vmatmul.bf16.gmra.mxu0 %v612
  %v1346 = vpop.f32.mrf.mxu0
  %v1347 = vadd.f32 %v1258, %v1346
  %v1348 = vpop.f32.mrf.mxu0
  %v1349 = vadd.f32 %v1260, %v1348
  %1350 = vmatmul.bf16.gmra.mxu0 %v619
  %v1351 = vpop.f32.mrf.mxu0
  %v1352 = vadd.f32 %v1263, %v1351
  %v1353 = vpop.f32.mrf.mxu0
  %v1354 = vadd.f32 %v1265, %v1353
  %1355 = vmatmul.bf16.gmra.mxu0 %v626
  %v1356 = vpop.f32.mrf.mxu0
  %v1357 = vadd.f32 %v1268, %v1356
  %v1358 = vpop.f32.mrf.mxu0
  %v1359 = vadd.f32 %v1270, %v1358
  %1360 = vmatmul.bf16.gmra.mxu0 %v633
  %v1361 = vpop.f32.mrf.mxu0
  %v1362 = vadd.f32 %v1273, %v1361
  %v1363 = vpop.f32.mrf.mxu0
  %v1364 = vadd.f32 %v1275, %v1363
  %1365 = vmatmul.bf16.gmra.mxu0 %v640
  %v1366 = vpop.f32.mrf.mxu0
  %v1367 = vadd.f32 %v1278, %v1366
  %v1368 = vpop.f32.mrf.mxu0
  %v1369 = vadd.f32 %v1280, %v1368
  %1370 = vmatmul.bf16.gmra.mxu0 %v647
  %v1371 = vpop.f32.mrf.mxu0
  %v1372 = vadd.f32 %v1283, %v1371
  %v1373 = vpop.f32.mrf.mxu0
  %v1374 = vadd.f32 %v1285, %v1373
  %1375 = vmatmul.bf16.gmra.mxu0 %v654
  %v1376 = vpop.f32.mrf.mxu0
  %v1377 = vadd.f32 %v1288, %v1376
  %v1378 = vpop.f32.mrf.mxu0
  %v1379 = vadd.f32 %v1290, %v1378
  %1380 = vmatmul.bf16.gmra.mxu0 %v661
  %v1381 = vpop.f32.mrf.mxu0
  %v1382 = vadd.f32 %v1293, %v1381
  %v1383 = vpop.f32.mrf.mxu0
  %v1384 = vadd.f32 %v1295, %v1383
  %1385 = vmatmul.bf16.gmra.mxu0 %v668
  %v1386 = vpop.f32.mrf.mxu0
  %v1387 = vadd.f32 %v1298, %v1386
  %v1388 = vpop.f32.mrf.mxu0
  %v1389 = vadd.f32 %v1300, %v1388
  %1390 = vmatmul.bf16.gmra.mxu0 %v675
  %v1391 = vpop.f32.mrf.mxu0
  %v1392 = vadd.f32 %v1303, %v1391
  %v1393 = vpop.f32.mrf.mxu0
  %v1394 = vadd.f32 %v1305, %v1393
  %1395 = vmatmul.bf16.gmra.mxu0 %v682
  %v1396 = vpop.f32.mrf.mxu0
  %v1397 = vadd.f32 %v1308, %v1396
  %v1398 = vpop.f32.mrf.mxu0
  %v1399 = vadd.f32 %v1310, %v1398
  %1400 = vmatmul.bf16.gmra.mxu0 %v689
  %v1401 = vpop.f32.mrf.mxu0
  %v1402 = vadd.f32 %v1313, %v1401
  %v1403 = vpop.f32.mrf.mxu0
  %v1404 = vadd.f32 %v1315, %v1403
  %1405 = vmatmul.bf16.gmra.mxu0 %v696
  %v1406 = vpop.f32.mrf.mxu0
  %v1407 = vadd.f32 %v1318, %v1406
  %v1408 = vpop.f32.mrf.mxu0
  %v1409 = vadd.f32 %v1320, %v1408
  %1410 = vmatmul.bf16.gmra.mxu0 %v703
  %v1411 = vpop.f32.mrf.mxu0
  %v1412 = vadd.f32 %v1323, %v1411
  %v1413 = vpop.f32.mrf.mxu0
  %v1414 = vadd.f32 %v1325, %v1413
  %1415 = vmatmul.bf16.gmra.mxu0 %v710
  %v1416 = vpop.f32.mrf.mxu0
  %v1417 = vadd.f32 %v1328, %v1416
  %v1418 = vpop.f32.mrf.mxu0
  %v1419 = vadd.f32 %v1330, %v1418
  %1420 = vdwg.mxu0
  %1421 = vmatpush.bf16.msra.mxu0 %v1038
  %1422 = vmatpush.bf16.msra.mxu0 %v1037
  %1423 = vmatpush.bf16.msra.mxu0 %v1036
  %1424 = vmatpush.bf16.msra.mxu0 %v1035
  %1425 = vmatpush.bf16.msra.mxu0 %v1034
  %1426 = vmatpush.bf16.msra.mxu0 %v1033
  %1427 = vmatpush.bf16.msra.mxu0 %v1032
  %1428 = vmatpush.bf16.msra.mxu0 %v1031
  %1429 = vmatmul.bf16.gmra.mxu0 %v606
  %v1430 = vpop.f32.mrf.mxu0
  %v1431 = vadd.f32 %v1342, %v1430
  %v1432 = vpop.f32.mrf.mxu0
  %v1433 = vadd.f32 %v1344, %v1432
  %1434 = vmatmul.bf16.gmra.mxu0 %v613
  %v1435 = vpop.f32.mrf.mxu0
  %v1436 = vadd.f32 %v1347, %v1435
  %v1437 = vpop.f32.mrf.mxu0
  %v1438 = vadd.f32 %v1349, %v1437
  %1439 = vmatmul.bf16.gmra.mxu0 %v620
  %v1440 = vpop.f32.mrf.mxu0
  %v1441 = vadd.f32 %v1352, %v1440
  %v1442 = vpop.f32.mrf.mxu0
  %v1443 = vadd.f32 %v1354, %v1442
  %1444 = vmatmul.bf16.gmra.mxu0 %v627
  %v1445 = vpop.f32.mrf.mxu0
  %v1446 = vadd.f32 %v1357, %v1445
  %v1447 = vpop.f32.mrf.mxu0
  %v1448 = vadd.f32 %v1359, %v1447
  %1449 = vmatmul.bf16.gmra.mxu0 %v634
  %v1450 = vpop.f32.mrf.mxu0
  %v1451 = vadd.f32 %v1362, %v1450
  %v1452 = vpop.f32.mrf.mxu0
  %v1453 = vadd.f32 %v1364, %v1452
  %1454 = vmatmul.bf16.gmra.mxu0 %v641
  %v1455 = vpop.f32.mrf.mxu0
  %v1456 = vadd.f32 %v1367, %v1455
  %v1457 = vpop.f32.mrf.mxu0
  %v1458 = vadd.f32 %v1369, %v1457
  %1459 = vmatmul.bf16.gmra.mxu0 %v648
  %v1460 = vpop.f32.mrf.mxu0
  %v1461 = vadd.f32 %v1372, %v1460
  %v1462 = vpop.f32.mrf.mxu0
  %v1463 = vadd.f32 %v1374, %v1462
  %1464 = vmatmul.bf16.gmra.mxu0 %v655
  %v1465 = vpop.f32.mrf.mxu0
  %v1466 = vadd.f32 %v1377, %v1465
  %v1467 = vpop.f32.mrf.mxu0
  %v1468 = vadd.f32 %v1379, %v1467
  %1469 = vmatmul.bf16.gmra.mxu0 %v662
  %v1470 = vpop.f32.mrf.mxu0
  %v1471 = vadd.f32 %v1382, %v1470
  %v1472 = vpop.f32.mrf.mxu0
  %v1473 = vadd.f32 %v1384, %v1472
  %1474 = vmatmul.bf16.gmra.mxu0 %v669
  %v1475 = vpop.f32.mrf.mxu0
  %v1476 = vadd.f32 %v1387, %v1475
  %v1477 = vpop.f32.mrf.mxu0
  %v1478 = vadd.f32 %v1389, %v1477
  %1479 = vmatmul.bf16.gmra.mxu0 %v676
  %v1480 = vpop.f32.mrf.mxu0
  %v1481 = vadd.f32 %v1392, %v1480
  %v1482 = vpop.f32.mrf.mxu0
  %v1483 = vadd.f32 %v1394, %v1482
  %1484 = vmatmul.bf16.gmra.mxu0 %v683
  %v1485 = vpop.f32.mrf.mxu0
  %v1486 = vadd.f32 %v1397, %v1485
  %v1487 = vpop.f32.mrf.mxu0
  %v1488 = vadd.f32 %v1399, %v1487
  %1489 = vmatmul.bf16.gmra.mxu0 %v690
  %v1490 = vpop.f32.mrf.mxu0
  %v1491 = vadd.f32 %v1402, %v1490
  %v1492 = vpop.f32.mrf.mxu0
  %v1493 = vadd.f32 %v1404, %v1492
  %1494 = vmatmul.bf16.gmra.mxu0 %v697
  %v1495 = vpop.f32.mrf.mxu0
  %v1496 = vadd.f32 %v1407, %v1495
  %v1497 = vpop.f32.mrf.mxu0
  %v1498 = vadd.f32 %v1409, %v1497
  %1499 = vmatmul.bf16.gmra.mxu0 %v704
  %v1500 = vpop.f32.mrf.mxu0
  %v1501 = vadd.f32 %v1412, %v1500
  %v1502 = vpop.f32.mrf.mxu0
  %v1503 = vadd.f32 %v1414, %v1502
  %1504 = vmatmul.bf16.gmra.mxu0 %v711
  %v1505 = vpop.f32.mrf.mxu0
  %v1506 = vadd.f32 %v1417, %v1505
  %v1507 = vpop.f32.mrf.mxu0
  %v1508 = vadd.f32 %v1419, %v1507
  %1509 = vdwg.mxu0
  %1510 = vmatpush.bf16.msra.mxu0 %v1046
  %1511 = vmatpush.bf16.msra.mxu0 %v1045
  %1512 = vmatpush.bf16.msra.mxu0 %v1044
  %1513 = vmatpush.bf16.msra.mxu0 %v1043
  %1514 = vmatpush.bf16.msra.mxu0 %v1042
  %1515 = vmatpush.bf16.msra.mxu0 %v1041
  %1516 = vmatpush.bf16.msra.mxu0 %v1040
  %1517 = vmatpush.bf16.msra.mxu0 %v1039
  %1518 = vmatmul.bf16.gmra.mxu0 %v607
  %v1519 = vpop.f32.mrf.mxu0
  %v1520 = vadd.f32 %v1431, %v1519
  %v1521 = vpop.f32.mrf.mxu0
  %v1522 = vadd.f32 %v1433, %v1521
  %1523 = vmatmul.bf16.gmra.mxu0 %v614
  %v1524 = vpop.f32.mrf.mxu0
  %v1525 = vadd.f32 %v1436, %v1524
  %v1526 = vpop.f32.mrf.mxu0
  %v1527 = vadd.f32 %v1438, %v1526
  %1528 = vmatmul.bf16.gmra.mxu0 %v621
  %v1529 = vpop.f32.mrf.mxu0
  %v1530 = vadd.f32 %v1441, %v1529
  %v1531 = vpop.f32.mrf.mxu0
  %v1532 = vadd.f32 %v1443, %v1531
  %1533 = vmatmul.bf16.gmra.mxu0 %v628
  %v1534 = vpop.f32.mrf.mxu0
  %v1535 = vadd.f32 %v1446, %v1534
  %v1536 = vpop.f32.mrf.mxu0
  %v1537 = vadd.f32 %v1448, %v1536
  %1538 = vmatmul.bf16.gmra.mxu0 %v635
  %v1539 = vpop.f32.mrf.mxu0
  %v1540 = vadd.f32 %v1451, %v1539
  %v1541 = vpop.f32.mrf.mxu0
  %v1542 = vadd.f32 %v1453, %v1541
  %1543 = vmatmul.bf16.gmra.mxu0 %v642
  %v1544 = vpop.f32.mrf.mxu0
  %v1545 = vadd.f32 %v1456, %v1544
  %v1546 = vpop.f32.mrf.mxu0
  %v1547 = vadd.f32 %v1458, %v1546
  %1548 = vmatmul.bf16.gmra.mxu0 %v649
  %v1549 = vpop.f32.mrf.mxu0
  %v1550 = vadd.f32 %v1461, %v1549
  %v1551 = vpop.f32.mrf.mxu0
  %v1552 = vadd.f32 %v1463, %v1551
  %1553 = vmatmul.bf16.gmra.mxu0 %v656
  %v1554 = vpop.f32.mrf.mxu0
  %v1555 = vadd.f32 %v1466, %v1554
  %v1556 = vpop.f32.mrf.mxu0
  %v1557 = vadd.f32 %v1468, %v1556
  %1558 = vmatmul.bf16.gmra.mxu0 %v663
  %v1559 = vpop.f32.mrf.mxu0
  %v1560 = vadd.f32 %v1471, %v1559
  %v1561 = vpop.f32.mrf.mxu0
  %v1562 = vadd.f32 %v1473, %v1561
  %1563 = vmatmul.bf16.gmra.mxu0 %v670
  %v1564 = vpop.f32.mrf.mxu0
  %v1565 = vadd.f32 %v1476, %v1564
  %v1566 = vpop.f32.mrf.mxu0
  %v1567 = vadd.f32 %v1478, %v1566
  %1568 = vmatmul.bf16.gmra.mxu0 %v677
  %v1569 = vpop.f32.mrf.mxu0
  %v1570 = vadd.f32 %v1481, %v1569
  %v1571 = vpop.f32.mrf.mxu0
  %v1572 = vadd.f32 %v1483, %v1571
  %1573 = vmatmul.bf16.gmra.mxu0 %v684
  %v1574 = vpop.f32.mrf.mxu0
  %v1575 = vadd.f32 %v1486, %v1574
  %v1576 = vpop.f32.mrf.mxu0
  %v1577 = vadd.f32 %v1488, %v1576
  %1578 = vmatmul.bf16.gmra.mxu0 %v691
  %v1579 = vpop.f32.mrf.mxu0
  %v1580 = vadd.f32 %v1491, %v1579
  %v1581 = vpop.f32.mrf.mxu0
  %v1582 = vadd.f32 %v1493, %v1581
  %1583 = vmatmul.bf16.gmra.mxu0 %v698
  %v1584 = vpop.f32.mrf.mxu0
  %v1585 = vadd.f32 %v1496, %v1584
  %v1586 = vpop.f32.mrf.mxu0
  %v1587 = vadd.f32 %v1498, %v1586
  %1588 = vmatmul.bf16.gmra.mxu0 %v705
  %v1589 = vpop.f32.mrf.mxu0
  %v1590 = vadd.f32 %v1501, %v1589
  %v1591 = vpop.f32.mrf.mxu0
  %v1592 = vadd.f32 %v1503, %v1591
  %1593 = vmatmul.bf16.gmra.mxu0 %v712
  %v1594 = vpop.f32.mrf.mxu0
  %v1595 = vadd.f32 %v1506, %v1594
  %v1596 = vpop.f32.mrf.mxu0
  %v1597 = vadd.f32 %v1508, %v1596
  %1598 = vdwg.mxu0
  %1599 = vmatpush.bf16.msra.mxu0 %v1054
  %1600 = vmatpush.bf16.msra.mxu0 %v1053
  %1601 = vmatpush.bf16.msra.mxu0 %v1052
  %1602 = vmatpush.bf16.msra.mxu0 %v1051
  %1603 = vmatpush.bf16.msra.mxu0 %v1050
  %1604 = vmatpush.bf16.msra.mxu0 %v1049
  %1605 = vmatpush.bf16.msra.mxu0 %v1048
  %1606 = vmatpush.bf16.msra.mxu0 %v1047
  %1607 = vmatmul.bf16.gmra.mxu0 %v608
  %v1608 = vpop.f32.mrf.mxu0
  %v1609 = vadd.f32 %v1520, %v1608
  %v1610 = vpop.f32.mrf.mxu0
  %v1611 = vadd.f32 %v1522, %v1610
  %1612 = vmatmul.bf16.gmra.mxu0 %v615
  %v1613 = vpop.f32.mrf.mxu0
  %v1614 = vadd.f32 %v1525, %v1613
  %v1615 = vpop.f32.mrf.mxu0
  %v1616 = vadd.f32 %v1527, %v1615
  %1617 = vmatmul.bf16.gmra.mxu0 %v622
  %v1618 = vpop.f32.mrf.mxu0
  %v1619 = vadd.f32 %v1530, %v1618
  %v1620 = vpop.f32.mrf.mxu0
  %v1621 = vadd.f32 %v1532, %v1620
  %1622 = vmatmul.bf16.gmra.mxu0 %v629
  %v1623 = vpop.f32.mrf.mxu0
  %v1624 = vadd.f32 %v1535, %v1623
  %v1625 = vpop.f32.mrf.mxu0
  %v1626 = vadd.f32 %v1537, %v1625
  %1627 = vmatmul.bf16.gmra.mxu0 %v636
  %v1628 = vpop.f32.mrf.mxu0
  %v1629 = vadd.f32 %v1540, %v1628
  %v1630 = vpop.f32.mrf.mxu0
  %v1631 = vadd.f32 %v1542, %v1630
  %1632 = vmatmul.bf16.gmra.mxu0 %v643
  %v1633 = vpop.f32.mrf.mxu0
  %v1634 = vadd.f32 %v1545, %v1633
  %v1635 = vpop.f32.mrf.mxu0
  %v1636 = vadd.f32 %v1547, %v1635
  %1637 = vmatmul.bf16.gmra.mxu0 %v650
  %v1638 = vpop.f32.mrf.mxu0
  %v1639 = vadd.f32 %v1550, %v1638
  %v1640 = vpop.f32.mrf.mxu0
  %v1641 = vadd.f32 %v1552, %v1640
  %1642 = vmatmul.bf16.gmra.mxu0 %v657
  %v1643 = vpop.f32.mrf.mxu0
  %v1644 = vadd.f32 %v1555, %v1643
  %v1645 = vpop.f32.mrf.mxu0
  %v1646 = vadd.f32 %v1557, %v1645
  %1647 = vmatmul.bf16.gmra.mxu0 %v664
  %v1648 = vpop.f32.mrf.mxu0
  %v1649 = vadd.f32 %v1560, %v1648
  %v1650 = vpop.f32.mrf.mxu0
  %v1651 = vadd.f32 %v1562, %v1650
  %1652 = vmatmul.bf16.gmra.mxu0 %v671
  %v1653 = vpop.f32.mrf.mxu0
  %v1654 = vadd.f32 %v1565, %v1653
  %v1655 = vpop.f32.mrf.mxu0
  %v1656 = vadd.f32 %v1567, %v1655
  %1657 = vmatmul.bf16.gmra.mxu0 %v678
  %v1658 = vpop.f32.mrf.mxu0
  %v1659 = vadd.f32 %v1570, %v1658
  %v1660 = vpop.f32.mrf.mxu0
  %v1661 = vadd.f32 %v1572, %v1660
  %1662 = vmatmul.bf16.gmra.mxu0 %v685
  %v1663 = vpop.f32.mrf.mxu0
  %v1664 = vadd.f32 %v1575, %v1663
  %v1665 = vpop.f32.mrf.mxu0
  %v1666 = vadd.f32 %v1577, %v1665
  %1667 = vmatmul.bf16.gmra.mxu0 %v692
  %v1668 = vpop.f32.mrf.mxu0
  %v1669 = vadd.f32 %v1580, %v1668
  %v1670 = vpop.f32.mrf.mxu0
  %v1671 = vadd.f32 %v1582, %v1670
  %1672 = vmatmul.bf16.gmra.mxu0 %v699
  %v1673 = vpop.f32.mrf.mxu0
  %v1674 = vadd.f32 %v1585, %v1673
  %v1675 = vpop.f32.mrf.mxu0
  %v1676 = vadd.f32 %v1587, %v1675
  %1677 = vmatmul.bf16.gmra.mxu0 %v706
  %v1678 = vpop.f32.mrf.mxu0
  %v1679 = vadd.f32 %v1590, %v1678
  %v1680 = vpop.f32.mrf.mxu0
  %v1681 = vadd.f32 %v1592, %v1680
  %1682 = vmatmul.bf16.gmra.mxu0 %v713
  %v1683 = vpop.f32.mrf.mxu0
  %v1684 = vadd.f32 %v1595, %v1683
  %v1685 = vpop.f32.mrf.mxu0
  %v1686 = vadd.f32 %v1597, %v1685
  %1687 = vdwg.mxu0
  %1688 = vmatpush.bf16.msra.mxu0 0
  %1689 = vmatpush.bf16.msra.mxu0 0
  %1690 = vmatpush.bf16.msra.mxu0 0
  %1691 = vmatpush.bf16.msra.mxu0 0
  %1692 = vmatpush.bf16.msra.mxu0 0
  %1693 = vmatpush.bf16.msra.mxu0 0
  %1694 = vmatpush.bf16.msra.mxu0 0
  %1695 = vmatpush.bf16.msra.mxu0 %v1055
  %1696 = vmatmul.bf16.gmra.mxu0 %v1107
  %v1697 = vpop.f32.mrf.mxu0
  %v1698 = vadd.f32 %v1609, %v1697
  %v1699 = vpop.f32.mrf.mxu0
  %v1700 = vadd.f32 %v1611, %v1699
  %1701 = vmatmul.bf16.gmra.mxu0 %v1110
  %v1702 = vpop.f32.mrf.mxu0
  %v1703 = vadd.f32 %v1614, %v1702
  %v1704 = vpop.f32.mrf.mxu0
  %v1705 = vadd.f32 %v1616, %v1704
  %1706 = vmatmul.bf16.gmra.mxu0 %v1113
  %v1707 = vpop.f32.mrf.mxu0
  %v1708 = vadd.f32 %v1619, %v1707
  %v1709 = vpop.f32.mrf.mxu0
  %v1710 = vadd.f32 %v1621, %v1709
  %1711 = vmatmul.bf16.gmra.mxu0 %v1116
  %v1712 = vpop.f32.mrf.mxu0
  %v1713 = vadd.f32 %v1624, %v1712
  %v1714 = vpop.f32.mrf.mxu0
  %v1715 = vadd.f32 %v1626, %v1714
  %1716 = vmatmul.bf16.gmra.mxu0 %v1119
  %v1717 = vpop.f32.mrf.mxu0
  %v1718 = vadd.f32 %v1629, %v1717
  %v1719 = vpop.f32.mrf.mxu0
  %v1720 = vadd.f32 %v1631, %v1719
  %1721 = vmatmul.bf16.gmra.mxu0 %v1122
  %v1722 = vpop.f32.mrf.mxu0
  %v1723 = vadd.f32 %v1634, %v1722
  %v1724 = vpop.f32.mrf.mxu0
  %v1725 = vadd.f32 %v1636, %v1724
  %1726 = vmatmul.bf16.gmra.mxu0 %v1125
  %v1727 = vpop.f32.mrf.mxu0
  %v1728 = vadd.f32 %v1639, %v1727
  %v1729 = vpop.f32.mrf.mxu0
  %v1730 = vadd.f32 %v1641, %v1729
  %1731 = vmatmul.bf16.gmra.mxu0 %v1128
  %v1732 = vpop.f32.mrf.mxu0
  %v1733 = vadd.f32 %v1644, %v1732
  %v1734 = vpop.f32.mrf.mxu0
  %v1735 = vadd.f32 %v1646, %v1734
  %1736 = vmatmul.bf16.gmra.mxu0 %v1131
  %v1737 = vpop.f32.mrf.mxu0
  %v1738 = vadd.f32 %v1649, %v1737
  %v1739 = vpop.f32.mrf.mxu0
  %v1740 = vadd.f32 %v1651, %v1739
  %1741 = vmatmul.bf16.gmra.mxu0 %v1134
  %v1742 = vpop.f32.mrf.mxu0
  %v1743 = vadd.f32 %v1654, %v1742
  %v1744 = vpop.f32.mrf.mxu0
  %v1745 = vadd.f32 %v1656, %v1744
  %1746 = vmatmul.bf16.gmra.mxu0 %v1137
  %v1747 = vpop.f32.mrf.mxu0
  %v1748 = vadd.f32 %v1659, %v1747
  %v1749 = vpop.f32.mrf.mxu0
  %v1750 = vadd.f32 %v1661, %v1749
  %1751 = vmatmul.bf16.gmra.mxu0 %v1140
  %v1752 = vpop.f32.mrf.mxu0
  %v1753 = vadd.f32 %v1664, %v1752
  %v1754 = vpop.f32.mrf.mxu0
  %v1755 = vadd.f32 %v1666, %v1754
  %1756 = vmatmul.bf16.gmra.mxu0 %v1143
  %v1757 = vpop.f32.mrf.mxu0
  %v1758 = vadd.f32 %v1669, %v1757
  %v1759 = vpop.f32.mrf.mxu0
  %v1760 = vadd.f32 %v1671, %v1759
  %1761 = vmatmul.bf16.gmra.mxu0 %v1146
  %v1762 = vpop.f32.mrf.mxu0
  %v1763 = vadd.f32 %v1674, %v1762
  %v1764 = vpop.f32.mrf.mxu0
  %v1765 = vadd.f32 %v1676, %v1764
  %1766 = vmatmul.bf16.gmra.mxu0 %v1149
  %v1767 = vpop.f32.mrf.mxu0
  %v1768 = vadd.f32 %v1679, %v1767
  %v1769 = vpop.f32.mrf.mxu0
  %v1770 = vadd.f32 %v1681, %v1769
  %1771 = vmatmul.bf16.gmra.mxu0 %v1152
  %v1772 = vpop.f32.mrf.mxu0
  %v1773 = vadd.f32 %v1684, %v1772
  %v1774 = vpop.f32.mrf.mxu0
  %v1775 = vadd.f32 %v1686, %v1774
  %1776 = vdwg.mxu0
  %v1777 = vmax.f32 %v1698, 0.0
  %v1778 = vmax.f32 %v1700, 0.0
  %v1779 = vmax.f32 %v1703, 0.0
  %v1780 = vmax.f32 %v1705, 0.0
  %v1781 = vmax.f32 %v1708, 0.0
  %v1782 = vmax.f32 %v1710, 0.0
  %v1783 = vmax.f32 %v1713, 0.0
  %v1784 = vmax.f32 %v1715, 0.0
  %v1785 = vmax.f32 %v1718, 0.0
  %v1786 = vmax.f32 %v1720, 0.0
  %v1787 = vmax.f32 %v1723, 0.0
  %v1788 = vmax.f32 %v1725, 0.0
  %v1789 = vmax.f32 %v1728, 0.0
  %v1790 = vmax.f32 %v1730, 0.0
  %v1791 = vmax.f32 %v1733, 0.0
  %v1792 = vmax.f32 %v1735, 0.0
  %v1793 = vmax.f32 %v1738, 0.0
  %v1794 = vmax.f32 %v1740, 0.0
  %v1795 = vmax.f32 %v1743, 0.0
  %v1796 = vmax.f32 %v1745, 0.0
  %v1797 = vmax.f32 %v1748, 0.0
  %v1798 = vmax.f32 %v1750, 0.0
  %v1799 = vmax.f32 %v1753, 0.0
  %v1800 = vmax.f32 %v1755, 0.0
  %v1801 = vmax.f32 %v1758, 0.0
  %v1802 = vmax.f32 %v1760, 0.0
  %v1803 = vmax.f32 %v1763, 0.0
  %v1804 = vmax.f32 %v1765, 0.0
  %v1805 = vmax.f32 %v1768, 0.0
  %v1806 = vmax.f32 %v1770, 0.0
  %v1807 = vmax.f32 %v1773, 0.0
  %v1808 = vmax.f32 %v1775, 0.0
  %v1809 = vpack.c.bf16 %v1778, %v1777
  %v1810 = vpack.c.bf16 %v1780, %v1779
  %v1811 = vpack.c.bf16 %v1782, %v1781
  %v1812 = vpack.c.bf16 %v1784, %v1783
  %v1813 = vpack.c.bf16 %v1786, %v1785
  %v1814 = vpack.c.bf16 %v1788, %v1787
  %v1815 = vpack.c.bf16 %v1790, %v1789
  %v1816 = vpack.c.bf16 %v1792, %v1791
  %v1817 = vpack.c.bf16 %v1794, %v1793
  %v1818 = vpack.c.bf16 %v1796, %v1795
  %v1819 = vpack.c.bf16 %v1798, %v1797
  %v1820 = vpack.c.bf16 %v1800, %v1799
  %v1821 = vpack.c.bf16 %v1802, %v1801
  %v1822 = vpack.c.bf16 %v1804, %v1803
  %v1823 = vpack.c.bf16 %v1806, %v1805
  %v1824 = vpack.c.bf16 %v1808, %v1807
  %v1825 = vld [vmem:[%s3] sm:$0xf]
  %v1826 = vld [vmem:[%s3 + $0x4] sm:$0xf]
  %v1827 = vld [vmem:[%s3 + $0x8] sm:$0xf]
  %v1828 = vld [vmem:[%s3 + $0xc] sm:$0xf]
  %v1829 = vld [vmem:[%s3 + $0x10] sm:$0xf]
  %v1830 = vld [vmem:[%s3 + $0x14] sm:$0xf]
  %v1831 = vld [vmem:[%s3 + $0x18] sm:$0xf]
  %v1832 = vld [vmem:[%s3 + $0x1c] sm:$0xf]
  %v1833 = vld [vmem:[%s3 + $0x20] sm:$0xf]
  %v1834 = vld [vmem:[%s3 + $0x24] sm:$0xf]
  %v1835 = vld [vmem:[%s3 + $0x28] sm:$0xf]
  %v1836 = vld [vmem:[%s3 + $0x2c] sm:$0xf]
  %v1837 = vld [vmem:[%s3 + $0x30] sm:$0xf]
  %v1838 = vld [vmem:[%s3 + $0x34] sm:$0xf]
  %v1839 = vld [vmem:[%s3 + $0x38] sm:$0xf]
  %v1840 = vld [vmem:[%s3 + $0x3c] sm:$0xf]
  %v1841 = vld [vmem:[%s4] sm:$0x1]
  %v1843 = vperm.slane %v1841, 0
  %v1861 = vunpack.c.l.b16 %v1825
  %v1862 = vunpack.c.l.b16 %v1826
  %v1863 = vunpack.c.l.b16 %v1827
  %v1864 = vunpack.c.l.b16 %v1828
  %v1865 = vunpack.c.l.b16 %v1829
  %v1866 = vunpack.c.l.b16 %v1830
  %v1867 = vunpack.c.l.b16 %v1831
  %v1868 = vunpack.c.l.b16 %v1832
  %v1869 = vunpack.c.l.b16 %v1833
  %v1870 = vunpack.c.l.b16 %v1834
  %v1871 = vunpack.c.l.b16 %v1835
  %v1872 = vunpack.c.l.b16 %v1836
  %v1873 = vunpack.c.l.b16 %v1837
  %v1874 = vunpack.c.l.b16 %v1838
  %v1875 = vunpack.c.l.b16 %v1839
  %v1876 = vunpack.c.l.b16 %v1840
  %v1877 = vpack.c.b16 %v1862, %v1861
  %v1878 = vpack.c.b16 %v1864, %v1863
  %v1879 = vpack.c.b16 %v1866, %v1865
  %v1880 = vpack.c.b16 %v1868, %v1867
  %v1881 = vpack.c.b16 %v1870, %v1869
  %v1882 = vpack.c.b16 %v1872, %v1871
  %v1883 = vpack.c.b16 %v1874, %v1873
  %v1884 = vpack.c.b16 %v1876, %v1875
  %1893 = vmatpush.bf16.msra.mxu0 %v1884
  %1894 = vmatpush.bf16.msra.mxu0 %v1883
  %1895 = vmatpush.bf16.msra.mxu0 %v1882
  %1896 = vmatpush.bf16.msra.mxu0 %v1881
  %1897 = vmatpush.bf16.msra.mxu0 %v1880
  %1898 = vmatpush.bf16.msra.mxu0 %v1879
  %1899 = vmatpush.bf16.msra.mxu0 %v1878
  %1900 = vmatpush.bf16.msra.mxu0 %v1877
  %1901 = vmatmul.bf16.gmra.mxu0 %v1809
  %v1902 = vpop.f32.mrf.mxu0
  %v1903 = vadd.f32 %v1843, %v1902
  %v1904 = vpop.f32.mrf.mxu0
  %v1905 = vadd.f32 %v1843, %v1904
  %1906 = vmatmul.bf16.gmra.mxu0 %v1810
  %v1907 = vpop.f32.mrf.mxu0
  %v1908 = vadd.f32 %v1843, %v1907
  %v1909 = vpop.f32.mrf.mxu0
  %v1910 = vadd.f32 %v1843, %v1909
  %1911 = vmatmul.bf16.gmra.mxu0 %v1811
  %v1912 = vpop.f32.mrf.mxu0
  %v1913 = vadd.f32 %v1843, %v1912
  %v1914 = vpop.f32.mrf.mxu0
  %v1915 = vadd.f32 %v1843, %v1914
  %1916 = vmatmul.bf16.gmra.mxu0 %v1812
  %v1917 = vpop.f32.mrf.mxu0
  %v1918 = vadd.f32 %v1843, %v1917
  %v1919 = vpop.f32.mrf.mxu0
  %v1920 = vadd.f32 %v1843, %v1919
  %1921 = vmatmul.bf16.gmra.mxu0 %v1813
  %v1922 = vpop.f32.mrf.mxu0
  %v1923 = vadd.f32 %v1843, %v1922
  %v1924 = vpop.f32.mrf.mxu0
  %v1925 = vadd.f32 %v1843, %v1924
  %1926 = vmatmul.bf16.gmra.mxu0 %v1814
  %v1927 = vpop.f32.mrf.mxu0
  %v1928 = vadd.f32 %v1843, %v1927
  %v1929 = vpop.f32.mrf.mxu0
  %v1930 = vadd.f32 %v1843, %v1929
  %1931 = vmatmul.bf16.gmra.mxu0 %v1815
  %v1932 = vpop.f32.mrf.mxu0
  %v1933 = vadd.f32 %v1843, %v1932
  %v1934 = vpop.f32.mrf.mxu0
  %v1935 = vadd.f32 %v1843, %v1934
  %1936 = vmatmul.bf16.gmra.mxu0 %v1816
  %v1937 = vpop.f32.mrf.mxu0
  %v1938 = vadd.f32 %v1843, %v1937
  %v1939 = vpop.f32.mrf.mxu0
  %v1940 = vadd.f32 %v1843, %v1939
  %1941 = vmatmul.bf16.gmra.mxu0 %v1817
  %v1942 = vpop.f32.mrf.mxu0
  %v1943 = vadd.f32 %v1843, %v1942
  %v1944 = vpop.f32.mrf.mxu0
  %v1945 = vadd.f32 %v1843, %v1944
  %1946 = vmatmul.bf16.gmra.mxu0 %v1818
  %v1947 = vpop.f32.mrf.mxu0
  %v1948 = vadd.f32 %v1843, %v1947
  %v1949 = vpop.f32.mrf.mxu0
  %v1950 = vadd.f32 %v1843, %v1949
  %1951 = vmatmul.bf16.gmra.mxu0 %v1819
  %v1952 = vpop.f32.mrf.mxu0
  %v1953 = vadd.f32 %v1843, %v1952
  %v1954 = vpop.f32.mrf.mxu0
  %v1955 = vadd.f32 %v1843, %v1954
  %1956 = vmatmul.bf16.gmra.mxu0 %v1820
  %v1957 = vpop.f32.mrf.mxu0
  %v1958 = vadd.f32 %v1843, %v1957
  %v1959 = vpop.f32.mrf.mxu0
  %v1960 = vadd.f32 %v1843, %v1959
  %1961 = vmatmul.bf16.gmra.mxu0 %v1821
  %v1962 = vpop.f32.mrf.mxu0
  %v1963 = vadd.f32 %v1843, %v1962
  %v1964 = vpop.f32.mrf.mxu0
  %v1965 = vadd.f32 %v1843, %v1964
  %1966 = vmatmul.bf16.gmra.mxu0 %v1822
  %v1967 = vpop.f32.mrf.mxu0
  %v1968 = vadd.f32 %v1843, %v1967
  %v1969 = vpop.f32.mrf.mxu0
  %v1970 = vadd.f32 %v1843, %v1969
  %1971 = vmatmul.bf16.gmra.mxu0 %v1823
  %v1972 = vpop.f32.mrf.mxu0
  %v1973 = vadd.f32 %v1843, %v1972
  %v1974 = vpop.f32.mrf.mxu0
  %v1975 = vadd.f32 %v1843, %v1974
  %1976 = vmatmul.bf16.gmra.mxu0 %v1824
  %v1977 = vpop.f32.mrf.mxu0
  %v1978 = vadd.f32 %v1843, %v1977
  %v1979 = vpop.f32.mrf.mxu0
  %v1980 = vadd.f32 %v1843, %v1979
  %1981 = vdwg.mxu0
  %1982 = vst [vmem:[%s5] sm:$0xff] %v1903
  %1983 = vst [vmem:[%s5 + $0x8] sm:$0xff] %v1905
  %1984 = vst [vmem:[%s5 + $0x10] sm:$0xff] %v1908
  %1985 = vst [vmem:[%s5 + $0x18] sm:$0xff] %v1910
  %1986 = vst [vmem:[%s5 + $0x20] sm:$0xff] %v1913
  %1987 = vst [vmem:[%s5 + $0x28] sm:$0xff] %v1915
  %1988 = vst [vmem:[%s5 + $0x30] sm:$0xff] %v1918
  %1989 = vst [vmem:[%s5 + $0x38] sm:$0xff] %v1920
  %1990 = vst [vmem:[%s5 + $0x40] sm:$0xff] %v1923
  %1991 = vst [vmem:[%s5 + $0x48] sm:$0xff] %v1925
  %1992 = vst [vmem:[%s5 + $0x50] sm:$0xff] %v1928
  %1993 = vst [vmem:[%s5 + $0x58] sm:$0xff] %v1930
  %1994 = vst [vmem:[%s5 + $0x60] sm:$0xff] %v1933
  %1995 = vst [vmem:[%s5 + $0x68] sm:$0xff] %v1935
  %1996 = vst [vmem:[%s5 + $0x70] sm:$0xff] %v1938
  %1997 = vst [vmem:[%s5 + $0x78] sm:$0xff] %v1940
  %1998 = vst [vmem:[%s5 + $0x80] sm:$0xff] %v1943
  %1999 = vst [vmem:[%s5 + $0x88] sm:$0xff] %v1945
  %2000 = vst [vmem:[%s5 + $0x90] sm:$0xff] %v1948
  %2001 = vst [vmem:[%s5 + $0x98] sm:$0xff] %v1950
  %2002 = vst [vmem:[%s5 + $0xa0] sm:$0xff] %v1953
  %2003 = vst [vmem:[%s5 + $0xa8] sm:$0xff] %v1955
  %2004 = vst [vmem:[%s5 + $0xb0] sm:$0xff] %v1958
  %2005 = vst [vmem:[%s5 + $0xb8] sm:$0xff] %v1960
  %2006 = vst [vmem:[%s5 + $0xc0] sm:$0xff] %v1963
  %2007 = vst [vmem:[%s5 + $0xc8] sm:$0xff] %v1965
  %2008 = vst [vmem:[%s5 + $0xd0] sm:$0xff] %v1968
  %2009 = vst [vmem:[%s5 + $0xd8] sm:$0xff] %v1970
  %2010 = vst [vmem:[%s5 + $0xe0] sm:$0xff] %v1973
  %2011 = vst [vmem:[%s5 + $0xe8] sm:$0xff] %v1975
  %2012 = vst [vmem:[%s5 + $0xf0] sm:$0xff] %v1978
  %2013 = vst [vmem:[%s5 + $0xf8] sm:$0xff] %v1980
  // Predicated region
  $region22: #{mnist_network_forward.1} parent=0 // pred_check
    _
  $region23: #{mnist_network_forward.1} parent=0 // pred_check_branch
    %2015 = sbr.rel (0) target = $region25
  $region24: #{mnist_network_forward.1} parent=0 // pred_region
    _
  $region25: #{mnist_network_forward.1} parent=0 // pred_fallthru
    _
  // Predicated region
  $region26: #{mnist_network_forward.1} parent=0 // pred_check
    _
  $region27: #{mnist_network_forward.1} parent=0 // pred_check_branch
    %2017 = sbr.rel (0) target = $region29
  $region28: #{mnist_network_forward.1} parent=0 // pred_region
    _
  $region29: #{mnist_network_forward.1} parent=0 // pred_fallthru
    _

</llo_original>
